<compile_context>
chip_gen: v5e
topology: v5e:2x2
jax: 0.10.0
libtpu: 0.0.40
codegen_flags: <defaults>
</compile_context>

<pallas_src>
import functools
import math

import jax
import jax.numpy as jnp
from jax.experimental import pallas as pl
from jax.experimental.pallas import tpu as pltpu
import numpy as np


def small_basic_block_kernel(x_ref, w1_ref, b1_ref, w2_ref, b2_ref,
                             w3_ref, b3_ref, w4_ref, b4_ref, o_ref,
                             *, H, W, Nb):
    """Nb images per grid step. Activations are (C, H*W): channels on
    sublanes, flattened spatial on lanes (lane-dense)."""
    HW = H * W

    # --- border masks: shared by every image in this block, (1, HW) only ----
    lane = jax.lax.broadcasted_iota(jnp.int32, (1, HW), 1)
    col = lane % W
    m_up = lane >= W            # row h-1 exists
    m_down = lane < HW - W      # row h+1 exists
    m_left = col >= 1           # col w-1 exists
    m_right = col < W - 1       # col w+1 exists

    # --- weights / biases: loaded once, reused for all Nb images ------------
    w1 = w1_ref[...]                      # (Cm, Cin)
    b1 = b1_ref[...]                      # (Cm, 1)
    w2_0, w2_1, w2_2 = w2_ref[0], w2_ref[1], w2_ref[2]   # (Cm, Cm) each
    b2 = b2_ref[...]
    w3_0, w3_1, w3_2 = w3_ref[0], w3_ref[1], w3_ref[2]
    b3 = b3_ref[...]
    w4 = w4_ref[...]                      # (Cout, Cm)
    b4 = b4_ref[...]                      # (Cout, 1)

    def one_image(i, carry):
        x = x_ref[i]                                              # (Cin, HW)

        # 1) 1x1 conv + ReLU:  (Cm, Cin) @ (Cin, HW)
        y1 = jnp.dot(w1, x, preferred_element_type=jnp.float32) + b1
        y1 = jnp.maximum(y1, 0.0)                                 # (Cm, HW)

        # 2) (3,1) conv along H, padding (1,0), + ReLU.
        #    Taps h-1 / h / h+1 == lane shifts by +-W (XLU roll) + edge mask.
        up = jnp.where(m_up, pltpu.roll(y1, W, axis=1), 0.0)          # y1[:, s-W]
        down = jnp.where(m_down, pltpu.roll(y1, HW - W, axis=1), 0.0)  # y1[:, s+W]
        y2 = (jnp.dot(w2_0, up, preferred_element_type=jnp.float32)
              + jnp.dot(w2_1, y1, preferred_element_type=jnp.float32)
              + jnp.dot(w2_2, down, preferred_element_type=jnp.float32)
              + b2)
        y2 = jnp.maximum(y2, 0.0)                                 # (Cm, HW)

        # 3) (1,3) conv along W, padding (0,1), + ReLU.
        #    Taps w-1 / w / w+1 == lane shifts by +-1 + row-edge mask.
        left = jnp.where(m_left, pltpu.roll(y2, 1, axis=1), 0.0)        # y2[:, s-1]
        right = jnp.where(m_right, pltpu.roll(y2, HW - 1, axis=1), 0.0)  # y2[:, s+1]
        y3 = (jnp.dot(w3_0, left, preferred_element_type=jnp.float32)
              + jnp.dot(w3_1, y2, preferred_element_type=jnp.float32)
              + jnp.dot(w3_2, right, preferred_element_type=jnp.float32)
              + b3)
        y3 = jnp.maximum(y3, 0.0)                                 # (Cm, HW)

        # 4) 1x1 conv (no ReLU): (Cout, Cm) @ (Cm, HW)
        o_ref[i] = jnp.dot(w4, y3, preferred_element_type=jnp.float32) + b4
        return carry

    jax.lax.fori_loop(0, Nb, one_image, 0, unroll=True)


def _choose_nb(N, Cin, Cout, HW):
    """Images per grid step: keep >= 2 grid steps (v7x: 2 TensorCores get
    work) while batching as much as the VMEM budget allows."""
    vmem_budget = 24 * 1024 * 1024                       # stay under v7x's 32 MiB default
    per_image = 2 * (Cin + Cout) * HW * 4                # double-buffered in + out, f32
    max_by_vmem = max(1, vmem_budget // max(per_image, 1))
    nb = min(max(1, N // 2), max_by_vmem)
    while nb > 1 and N % nb != 0:                        # keep full blocks
        nb -= 1
    return max(nb, 1)


def small_basic_block_forward(x_nchw, kernel_params, *, nb=None):
    """x_nchw: (N, Cin, H, W) float32. Returns (N, Cout, H, W)."""
    w1, b1, w2, b2, w3, b3, w4, b4 = kernel_params
    N, Cin, H, W = x_nchw.shape
    Cm = w1.shape[0]
    Cout = w4.shape[0]
    HW = H * W

    if nb is None:
        nb = _choose_nb(N, Cin, Cout, HW)
    assert N % nb == 0, (N, nb)
    steps = N // nb

    # Pure reshape (no transpose, no extra HBM pass): NCHW -> (N, C, H*W).
    x_flat = x_nchw.reshape(N, Cin, HW)

    kernel = functools.partial(small_basic_block_kernel, H=H, W=W, Nb=nb)

    out_flat = pl.pallas_call(
        kernel,
        out_shape=jax.ShapeDtypeStruct((N, Cout, HW), jnp.float32),
        grid_spec=pltpu.PrefetchScalarGridSpec(
            num_scalar_prefetch=0,
            grid=(steps,),
            in_specs=[
                pl.BlockSpec((nb, Cin, HW), lambda n: (n, 0, 0)),
                pl.BlockSpec((Cm, Cin), lambda n: (0, 0)),
                pl.BlockSpec((Cm, 1), lambda n: (0, 0)),
                pl.BlockSpec((3, Cm, Cm), lambda n: (0, 0, 0)),
                pl.BlockSpec((Cm, 1), lambda n: (0, 0)),
                pl.BlockSpec((3, Cm, Cm), lambda n: (0, 0, 0)),
                pl.BlockSpec((Cm, 1), lambda n: (0, 0)),
                pl.BlockSpec((Cout, Cm), lambda n: (0, 0)),
                pl.BlockSpec((Cout, 1), lambda n: (0, 0)),
            ],
            out_specs=pl.BlockSpec((nb, Cout, HW), lambda n: (n, 0, 0)),
        ),
        # batch blocks are fully independent -> shard across v7x's 2 TCs.
        compiler_params=pltpu.CompilerParams(dimension_semantics=("parallel",)),
    )(x_flat, w1, b1, w2, b2, w3, b3, w4, b4)

    return out_flat.reshape(N, Cout, H, W)


def init_params(key, ch_in, ch_out):
    """Deterministic synthetic params with PyTorch Conv2d shapes, plus the
    matmul-friendly (per-tap, transposed) forms consumed by the kernel."""
    cm = ch_out // 4
    keys = jax.random.split(key, 8)

    def u(k, shape, fan_in):
        bound = 1.0 / math.sqrt(fan_in)
        return jax.random.uniform(k, shape, jnp.float32, -bound, bound)

    # PyTorch layout: weight (Cout, Cin, kh, kw), bias (Cout,)
    w1_t = u(keys[0], (cm, ch_in, 1, 1), ch_in)
    b1_t = u(keys[1], (cm,), ch_in)
    w2_t = u(keys[2], (cm, cm, 3, 1), cm * 3)
    b2_t = u(keys[3], (cm,), cm * 3)
    w3_t = u(keys[4], (cm, cm, 1, 3), cm * 3)
    b3_t = u(keys[5], (cm,), cm * 3)
    w4_t = u(keys[6], (ch_out, cm, 1, 1), cm)
    b4_t = u(keys[7], (ch_out,), cm)

    # Kernel forms: W-left matmuls on (C, H*W) activations; the directional
    # convs keep their 3 taps on a leading axis -> three (Cm, Cm) matrices.
    w1 = w1_t[:, :, 0, 0]                                             # (Cm, Cin)
    w2 = jnp.stack([w2_t[:, :, k, 0] for k in range(3)], axis=0)      # (3, Cm, Cm)
    w3 = jnp.stack([w3_t[:, :, 0, k] for k in range(3)], axis=0)      # (3, Cm, Cm)
    w4 = w4_t[:, :, 0, 0]                                             # (Cout, Cm)

    kernel_params = (w1, b1_t.reshape(cm, 1), w2, b2_t.reshape(cm, 1),
                     w3, b3_t.reshape(cm, 1), w4, b4_t.reshape(ch_out, 1))
    torch_params = (w1_t, b1_t, w2_t, b2_t, w3_t, b3_t, w4_t, b4_t)
    return kernel_params, torch_params


def ref_forward(x_nchw, torch_params):
    """Pure-JAX reference using lax.conv, mirrors the PyTorch module exactly."""
    w1, b1, w2, b2, w3, b3, w4, b4 = torch_params

    def conv(x, w, b, pad):
        y = jax.lax.conv_general_dilated(
            x, w, window_strides=(1, 1), padding=pad,
            dimension_numbers=('NCHW', 'OIHW', 'NCHW'))
        return y + b.reshape(1, -1, 1, 1)

    y = jax.nn.relu(conv(x_nchw, w1, b1, [(0, 0), (0, 0)]))
    y = jax.nn.relu(conv(y, w2, b2, [(1, 1), (0, 0)]))
    y = jax.nn.relu(conv(y, w3, b3, [(0, 0), (1, 1)]))
    return conv(y, w4, b4, [(0, 0), (0, 0)])


if __name__ == "__main__":
    key = jax.random.PRNGKey(0)
    k_x, k_p = jax.random.split(key)

    # Small shapes consistent with the module; N=8 exercises the batched
    # (Nb=4 images per grid step, grid=(2,)) path.
    N, CH_IN, CH_OUT, H, W = 8, 4, 16, 16, 16
    x = jax.random.normal(k_x, (N, CH_IN, H, W), dtype=jnp.float32)

    kernel_params, torch_params = init_params(k_p, CH_IN, CH_OUT)

    out = small_basic_block_forward(x, kernel_params)
    out = jax.block_until_ready(out)

    ref = jax.block_until_ready(ref_forward(x, torch_params))
    assert out.shape == (N, CH_OUT, H, W), out.shape
    np.testing.assert_allclose(np.asarray(out), np.asarray(ref),
                               rtol=2e-5, atol=2e-5)
    print("KERNEL_OK")
</pallas_src>

<mosaic_0001>
module attributes {stable_mosaic.version = 11 : i64} {
  func.func @small_basic_block_kernel(%arg0: i32, %arg1: memref<4x4x256xf32, #tpu.memory_space<vmem>>, %arg2: memref<4x4xf32, #tpu.memory_space<vmem>>, %arg3: memref<4x1xf32, #tpu.memory_space<vmem>>, %arg4: memref<3x4x4xf32, #tpu.memory_space<vmem>>, %arg5: memref<4x1xf32, #tpu.memory_space<vmem>>, %arg6: memref<3x4x4xf32, #tpu.memory_space<vmem>>, %arg7: memref<4x1xf32, #tpu.memory_space<vmem>>, %arg8: memref<16x4xf32, #tpu.memory_space<vmem>>, %arg9: memref<16x1xf32, #tpu.memory_space<vmem>>, %arg10: memref<4x16x256xf32, #tpu.memory_space<vmem>>) attributes {dimension_semantics = [#tpu.dimension_semantics<parallel>], iteration_bounds = array<i64: 2>, scalar_prefetch = 0 : i64, scratch_operands = 0 : i64, tpu.core_type = #tpu.core_type<tc>, window_params = [{transform_indices = @transform_0, window_bounds = array<i64: 4, 4, 256>}, {pipeline_mode = #tpu.pipeline_mode<synchronous>, transform_indices = @transform_1, window_bounds = array<i64: 4, 4>}, {pipeline_mode = #tpu.pipeline_mode<synchronous>, transform_indices = @transform_2, window_bounds = array<i64: 4, 1>}, {pipeline_mode = #tpu.pipeline_mode<synchronous>, transform_indices = @transform_3, window_bounds = array<i64: 3, 4, 4>}, {pipeline_mode = #tpu.pipeline_mode<synchronous>, transform_indices = @transform_4, window_bounds = array<i64: 4, 1>}, {pipeline_mode = #tpu.pipeline_mode<synchronous>, transform_indices = @transform_5, window_bounds = array<i64: 3, 4, 4>}, {pipeline_mode = #tpu.pipeline_mode<synchronous>, transform_indices = @transform_6, window_bounds = array<i64: 4, 1>}, {pipeline_mode = #tpu.pipeline_mode<synchronous>, transform_indices = @transform_7, window_bounds = array<i64: 16, 4>}, {pipeline_mode = #tpu.pipeline_mode<synchronous>, transform_indices = @transform_8, window_bounds = array<i64: 16, 1>}, {transform_indices = @transform_9, window_bounds = array<i64: 4, 16, 256>}]} {
    %0 = tpu.iota {dimensions = array<i32: 1>} : vector<1x256xi32>
    %c16_i32 = arith.constant 16 : i32
    %c0_i32 = arith.constant 0 : i32
    %1 = arith.cmpi eq, %c16_i32, %c0_i32 : i32
    %c1_i32 = arith.constant 1 : i32
    %2 = arith.select %1, %c1_i32, %c16_i32 : i32
    %3 = vector.broadcast %2 : i32 to vector<1x256xi32>
    %4 = arith.remsi %0, %3 : vector<1x256xi32>
    %c0_i32_0 = arith.constant 0 : i32
    %5 = vector.broadcast %c0_i32_0 : i32 to vector<1x256xi32>
    %6 = arith.cmpi ne, %4, %5 : vector<1x256xi32>
    %c0_i32_1 = arith.constant 0 : i32
    %7 = vector.broadcast %c0_i32_1 : i32 to vector<1x256xi32>
    %8 = arith.cmpi slt, %4, %7 : vector<1x256xi32>
    %c0_i32_2 = arith.constant 0 : i32
    %9 = arith.cmpi slt, %2, %c0_i32_2 : i32
    %10 = vector.broadcast %9 : i1 to vector<1x256xi1>
    %11 = vector.broadcast %10 : vector<1x256xi1> to vector<1x256xi1>
    %12 = arith.xori %8, %11 : vector<1x256xi1>
    %13 = arith.andi %12, %6 : vector<1x256xi1>
    %14 = vector.broadcast %2 : i32 to vector<1x256xi32>
    %15 = arith.addi %4, %14 : vector<1x256xi32>
    %16 = arith.select %13, %15, %4 : vector<1x256xi1>, vector<1x256xi32>
    %c16_i32_3 = arith.constant 16 : i32
    %17 = vector.broadcast %c16_i32_3 : i32 to vector<1x256xi32>
    %18 = arith.cmpi sge, %0, %17 : vector<1x256xi32>
    %c240_i32 = arith.constant 240 : i32
    %19 = vector.broadcast %c240_i32 : i32 to vector<1x256xi32>
    %20 = arith.cmpi slt, %0, %19 : vector<1x256xi32>
    %c1_i32_4 = arith.constant 1 : i32
    %21 = vector.broadcast %c1_i32_4 : i32 to vector<1x256xi32>
    %22 = arith.cmpi sge, %16, %21 : vector<1x256xi32>
    %c15_i32 = arith.constant 15 : i32
    %23 = vector.broadcast %c15_i32 : i32 to vector<1x256xi32>
    %24 = arith.cmpi slt, %16, %23 : vector<1x256xi32>
    %c0 = arith.constant 0 : index
    %c0_5 = arith.constant 0 : index
    %25 = vector.load %arg2[%c0, %c0_5] : memref<4x4xf32, #tpu.memory_space<vmem>>, vector<4x4xf32>
    %c0_6 = arith.constant 0 : index
    %c0_7 = arith.constant 0 : index
    %26 = vector.load %arg3[%c0_6, %c0_7] : memref<4x1xf32, #tpu.memory_space<vmem>>, vector<4x1xf32>
    %c0_8 = arith.constant 0 : index
    %c0_9 = arith.constant 0 : index
    %c0_10 = arith.constant 0 : index
    %27 = vector.load %arg4[%c0_8, %c0_9, %c0_10] : memref<3x4x4xf32, #tpu.memory_space<vmem>>, vector<1x4x4xf32>
    %28 = vector.shape_cast %27 : vector<1x4x4xf32> to vector<4x4xf32>
    %c1 = arith.constant 1 : index
    %c0_11 = arith.constant 0 : index
    %c0_12 = arith.constant 0 : index
    %29 = vector.load %arg4[%c1, %c0_11, %c0_12] : memref<3x4x4xf32, #tpu.memory_space<vmem>>, vector<1x4x4xf32>
    %30 = vector.shape_cast %29 : vector<1x4x4xf32> to vector<4x4xf32>
    %c2 = arith.constant 2 : index
    %c0_13 = arith.constant 0 : index
    %c0_14 = arith.constant 0 : index
    %31 = vector.load %arg4[%c2, %c0_13, %c0_14] : memref<3x4x4xf32, #tpu.memory_space<vmem>>, vector<1x4x4xf32>
    %32 = vector.shape_cast %31 : vector<1x4x4xf32> to vector<4x4xf32>
    %c0_15 = arith.constant 0 : index
    %c0_16 = arith.constant 0 : index
    %33 = vector.load %arg5[%c0_15, %c0_16] : memref<4x1xf32, #tpu.memory_space<vmem>>, vector<4x1xf32>
    %c0_17 = arith.constant 0 : index
    %c0_18 = arith.constant 0 : index
    %c0_19 = arith.constant 0 : index
    %34 = vector.load %arg6[%c0_17, %c0_18, %c0_19] : memref<3x4x4xf32, #tpu.memory_space<vmem>>, vector<1x4x4xf32>
    %35 = vector.shape_cast %34 : vector<1x4x4xf32> to vector<4x4xf32>
    %c1_20 = arith.constant 1 : index
    %c0_21 = arith.constant 0 : index
    %c0_22 = arith.constant 0 : index
    %36 = vector.load %arg6[%c1_20, %c0_21, %c0_22] : memref<3x4x4xf32, #tpu.memory_space<vmem>>, vector<1x4x4xf32>
    %37 = vector.shape_cast %36 : vector<1x4x4xf32> to vector<4x4xf32>
    %c2_23 = arith.constant 2 : index
    %c0_24 = arith.constant 0 : index
    %c0_25 = arith.constant 0 : index
    %38 = vector.load %arg6[%c2_23, %c0_24, %c0_25] : memref<3x4x4xf32, #tpu.memory_space<vmem>>, vector<1x4x4xf32>
    %39 = vector.shape_cast %38 : vector<1x4x4xf32> to vector<4x4xf32>
    %c0_26 = arith.constant 0 : index
    %c0_27 = arith.constant 0 : index
    %40 = vector.load %arg7[%c0_26, %c0_27] : memref<4x1xf32, #tpu.memory_space<vmem>>, vector<4x1xf32>
    %c0_28 = arith.constant 0 : index
    %c0_29 = arith.constant 0 : index
    %41 = vector.load %arg8[%c0_28, %c0_29] : memref<16x4xf32, #tpu.memory_space<vmem>>, vector<16x4xf32>
    %c0_30 = arith.constant 0 : index
    %c0_31 = arith.constant 0 : index
    %42 = vector.load %arg9[%c0_30, %c0_31] : memref<16x1xf32, #tpu.memory_space<vmem>>, vector<16x1xf32>
    %c0_i32_32 = arith.constant 0 : i32
    %43 = arith.index_cast %c0_i32_32 : i32 to index
    %c0_33 = arith.constant 0 : index
    %c0_34 = arith.constant 0 : index
    %44 = vector.load %arg1[%43, %c0_33, %c0_34] : memref<4x4x256xf32, #tpu.memory_space<vmem>>, vector<1x4x256xf32>
    %45 = vector.shape_cast %44 : vector<1x4x256xf32> to vector<4x256xf32>
    %cst = arith.constant dense<0.000000e+00> : vector<4x256xf32>
    %46 = tpu.matmul %25, %45, %cst {dimension_numbers = #tpu.dot_dimension_numbers<[1], [0], [0], [1], [0, 0, 1, 1], [], []>} : vector<4x4xf32>, vector<4x256xf32>, vector<4x256xf32> -> vector<4x256xf32>
    %47 = vector.broadcast %26 : vector<4x1xf32> to vector<4x256xf32>
    %48 = arith.addf %46, %47 : vector<4x256xf32>
    %cst_35 = arith.constant 0.000000e+00 : f32
    %49 = vector.broadcast %cst_35 : f32 to vector<4x256xf32>
    %50 = arith.maximumf %48, %49 : vector<4x256xf32>
    %c16_i32_36 = arith.constant 16 : i32
    %51 = tpu.dynamic_rotate %50 by %c16_i32_36 dim 1 : vector<4x256xf32>, i32 -> vector<4x256xf32>
    %cst_37 = arith.constant 0.000000e+00 : f32
    %52 = vector.shape_cast %18 : vector<1x256xi1> to vector<1x256xi1>
    %53 = vector.broadcast %52 : vector<1x256xi1> to vector<4x256xi1>
    %54 = vector.broadcast %cst_37 : f32 to vector<4x256xf32>
    %55 = arith.select %53, %51, %54 : vector<4x256xi1>, vector<4x256xf32>
    %c240_i32_38 = arith.constant 240 : i32
    %56 = tpu.dynamic_rotate %50 by %c240_i32_38 dim 1 : vector<4x256xf32>, i32 -> vector<4x256xf32>
    %cst_39 = arith.constant 0.000000e+00 : f32
    %57 = vector.shape_cast %20 : vector<1x256xi1> to vector<1x256xi1>
    %58 = vector.broadcast %57 : vector<1x256xi1> to vector<4x256xi1>
    %59 = vector.broadcast %cst_39 : f32 to vector<4x256xf32>
    %60 = arith.select %58, %56, %59 : vector<4x256xi1>, vector<4x256xf32>
    %cst_40 = arith.constant dense<0.000000e+00> : vector<4x256xf32>
    %61 = tpu.matmul %28, %55, %cst_40 {dimension_numbers = #tpu.dot_dimension_numbers<[1], [0], [0], [1], [0, 0, 1, 1], [], []>} : vector<4x4xf32>, vector<4x256xf32>, vector<4x256xf32> -> vector<4x256xf32>
    %cst_41 = arith.constant dense<0.000000e+00> : vector<4x256xf32>
    %62 = tpu.matmul %30, %50, %cst_41 {dimension_numbers = #tpu.dot_dimension_numbers<[1], [0], [0], [1], [0, 0, 1, 1], [], []>} : vector<4x4xf32>, vector<4x256xf32>, vector<4x256xf32> -> vector<4x256xf32>
    %63 = arith.addf %61, %62 : vector<4x256xf32>
    %cst_42 = arith.constant dense<0.000000e+00> : vector<4x256xf32>
    %64 = tpu.matmul %32, %60, %cst_42 {dimension_numbers = #tpu.dot_dimension_numbers<[1], [0], [0], [1], [0, 0, 1, 1], [], []>} : vector<4x4xf32>, vector<4x256xf32>, vector<4x256xf32> -> vector<4x256xf32>
    %65 = arith.addf %63, %64 : vector<4x256xf32>
    %66 = vector.broadcast %33 : vector<4x1xf32> to vector<4x256xf32>
    %67 = arith.addf %65, %66 : vector<4x256xf32>
    %cst_43 = arith.constant 0.000000e+00 : f32
    %68 = vector.broadcast %cst_43 : f32 to vector<4x256xf32>
    %69 = arith.maximumf %67, %68 : vector<4x256xf32>
    %c1_i32_44 = arith.constant 1 : i32
    %70 = tpu.dynamic_rotate %69 by %c1_i32_44 dim 1 : vector<4x256xf32>, i32 -> vector<4x256xf32>
    %cst_45 = arith.constant 0.000000e+00 : f32
    %71 = vector.shape_cast %22 : vector<1x256xi1> to vector<1x256xi1>
    %72 = vector.broadcast %71 : vector<1x256xi1> to vector<4x256xi1>
    %73 = vector.broadcast %cst_45 : f32 to vector<4x256xf32>
    %74 = arith.select %72, %70, %73 : vector<4x256xi1>, vector<4x256xf32>
    %c255_i32 = arith.constant 255 : i32
    %75 = tpu.dynamic_rotate %69 by %c255_i32 dim 1 : vector<4x256xf32>, i32 -> vector<4x256xf32>
    %cst_46 = arith.constant 0.000000e+00 : f32
    %76 = vector.shape_cast %24 : vector<1x256xi1> to vector<1x256xi1>
    %77 = vector.broadcast %76 : vector<1x256xi1> to vector<4x256xi1>
    %78 = vector.broadcast %cst_46 : f32 to vector<4x256xf32>
    %79 = arith.select %77, %75, %78 : vector<4x256xi1>, vector<4x256xf32>
    %cst_47 = arith.constant dense<0.000000e+00> : vector<4x256xf32>
    %80 = tpu.matmul %35, %74, %cst_47 {dimension_numbers = #tpu.dot_dimension_numbers<[1], [0], [0], [1], [0, 0, 1, 1], [], []>} : vector<4x4xf32>, vector<4x256xf32>, vector<4x256xf32> -> vector<4x256xf32>
    %cst_48 = arith.constant dense<0.000000e+00> : vector<4x256xf32>
    %81 = tpu.matmul %37, %69, %cst_48 {dimension_numbers = #tpu.dot_dimension_numbers<[1], [0], [0], [1], [0, 0, 1, 1], [], []>} : vector<4x4xf32>, vector<4x256xf32>, vector<4x256xf32> -> vector<4x256xf32>
    %82 = arith.addf %80, %81 : vector<4x256xf32>
    %cst_49 = arith.constant dense<0.000000e+00> : vector<4x256xf32>
    %83 = tpu.matmul %39, %79, %cst_49 {dimension_numbers = #tpu.dot_dimension_numbers<[1], [0], [0], [1], [0, 0, 1, 1], [], []>} : vector<4x4xf32>, vector<4x256xf32>, vector<4x256xf32> -> vector<4x256xf32>
    %84 = arith.addf %82, %83 : vector<4x256xf32>
    %85 = vector.broadcast %40 : vector<4x1xf32> to vector<4x256xf32>
    %86 = arith.addf %84, %85 : vector<4x256xf32>
    %cst_50 = arith.constant 0.000000e+00 : f32
    %87 = vector.broadcast %cst_50 : f32 to vector<4x256xf32>
    %88 = arith.maximumf %86, %87 : vector<4x256xf32>
    %cst_51 = arith.constant dense<0.000000e+00> : vector<16x256xf32>
    %89 = tpu.matmul %41, %88, %cst_51 {dimension_numbers = #tpu.dot_dimension_numbers<[1], [0], [0], [1], [0, 0, 1, 1], [], []>} : vector<16x4xf32>, vector<4x256xf32>, vector<16x256xf32> -> vector<16x256xf32>
    %90 = vector.broadcast %42 : vector<16x1xf32> to vector<16x256xf32>
    %91 = arith.addf %89, %90 : vector<16x256xf32>
    %92 = arith.index_cast %c0_i32_32 : i32 to index
    %c0_52 = arith.constant 0 : index
    %c0_53 = arith.constant 0 : index
    %93 = vector.load %arg10[%92, %c0_52, %c0_53] : memref<4x16x256xf32, #tpu.memory_space<vmem>>, vector<1x16x256xf32>
    %94 = vector.shape_cast %93 : vector<1x16x256xf32> to vector<16x256xf32>
    %95 = vector.shape_cast %91 : vector<16x256xf32> to vector<1x16x256xf32>
    tpu.vector_store %arg10[%92, %c0_52, %c0_53], %95 {strides = array<i32>} : memref<4x16x256xf32, #tpu.memory_space<vmem>>, vector<1x16x256xf32>,
    %c1_i32_54 = arith.constant 1 : i32
    %96 = arith.index_cast %c1_i32_54 : i32 to index
    %c0_55 = arith.constant 0 : index
    %c0_56 = arith.constant 0 : index
    %97 = vector.load %arg1[%96, %c0_55, %c0_56] : memref<4x4x256xf32, #tpu.memory_space<vmem>>, vector<1x4x256xf32>
    %98 = vector.shape_cast %97 : vector<1x4x256xf32> to vector<4x256xf32>
    %cst_57 = arith.constant dense<0.000000e+00> : vector<4x256xf32>
    %99 = tpu.matmul %25, %98, %cst_57 {dimension_numbers = #tpu.dot_dimension_numbers<[1], [0], [0], [1], [0, 0, 1, 1], [], []>} : vector<4x4xf32>, vector<4x256xf32>, vector<4x256xf32> -> vector<4x256xf32>
    %100 = vector.broadcast %26 : vector<4x1xf32> to vector<4x256xf32>
    %101 = arith.addf %99, %100 : vector<4x256xf32>
    %cst_58 = arith.constant 0.000000e+00 : f32
    %102 = vector.broadcast %cst_58 : f32 to vector<4x256xf32>
    %103 = arith.maximumf %101, %102 : vector<4x256xf32>
    %c16_i32_59 = arith.constant 16 : i32
    %104 = tpu.dynamic_rotate %103 by %c16_i32_59 dim 1 : vector<4x256xf32>, i32 -> vector<4x256xf32>
    %cst_60 = arith.constant 0.000000e+00 : f32
    %105 = vector.shape_cast %18 : vector<1x256xi1> to vector<1x256xi1>
    %106 = vector.broadcast %105 : vector<1x256xi1> to vector<4x256xi1>
    %107 = vector.broadcast %cst_60 : f32 to vector<4x256xf32>
    %108 = arith.select %106, %104, %107 : vector<4x256xi1>, vector<4x256xf32>
    %c240_i32_61 = arith.constant 240 : i32
    %109 = tpu.dynamic_rotate %103 by %c240_i32_61 dim 1 : vector<4x256xf32>, i32 -> vector<4x256xf32>
    %cst_62 = arith.constant 0.000000e+00 : f32
    %110 = vector.shape_cast %20 : vector<1x256xi1> to vector<1x256xi1>
    %111 = vector.broadcast %110 : vector<1x256xi1> to vector<4x256xi1>
    %112 = vector.broadcast %cst_62 : f32 to vector<4x256xf32>
    %113 = arith.select %111, %109, %112 : vector<4x256xi1>, vector<4x256xf32>
    %cst_63 = arith.constant dense<0.000000e+00> : vector<4x256xf32>
    %114 = tpu.matmul %28, %108, %cst_63 {dimension_numbers = #tpu.dot_dimension_numbers<[1], [0], [0], [1], [0, 0, 1, 1], [], []>} : vector<4x4xf32>, vector<4x256xf32>, vector<4x256xf32> -> vector<4x256xf32>
    %cst_64 = arith.constant dense<0.000000e+00> : vector<4x256xf32>
    %115 = tpu.matmul %30, %103, %cst_64 {dimension_numbers = #tpu.dot_dimension_numbers<[1], [0], [0], [1], [0, 0, 1, 1], [], []>} : vector<4x4xf32>, vector<4x256xf32>, vector<4x256xf32> -> vector<4x256xf32>
    %116 = arith.addf %114, %115 : vector<4x256xf32>
    %cst_65 = arith.constant dense<0.000000e+00> : vector<4x256xf32>
    %117 = tpu.matmul %32, %113, %cst_65 {dimension_numbers = #tpu.dot_dimension_numbers<[1], [0], [0], [1], [0, 0, 1, 1], [], []>} : vector<4x4xf32>, vector<4x256xf32>, vector<4x256xf32> -> vector<4x256xf32>
    %118 = arith.addf %116, %117 : vector<4x256xf32>
    %119 = vector.broadcast %33 : vector<4x1xf32> to vector<4x256xf32>
    %120 = arith.addf %118, %119 : vector<4x256xf32>
    %cst_66 = arith.constant 0.000000e+00 : f32
    %121 = vector.broadcast %cst_66 : f32 to vector<4x256xf32>
    %122 = arith.maximumf %120, %121 : vector<4x256xf32>
    %c1_i32_67 = arith.constant 1 : i32
    %123 = tpu.dynamic_rotate %122 by %c1_i32_67 dim 1 : vector<4x256xf32>, i32 -> vector<4x256xf32>
    %cst_68 = arith.constant 0.000000e+00 : f32
    %124 = vector.shape_cast %22 : vector<1x256xi1> to vector<1x256xi1>
    %125 = vector.broadcast %124 : vector<1x256xi1> to vector<4x256xi1>
    %126 = vector.broadcast %cst_68 : f32 to vector<4x256xf32>
    %127 = arith.select %125, %123, %126 : vector<4x256xi1>, vector<4x256xf32>
    %c255_i32_69 = arith.constant 255 : i32
    %128 = tpu.dynamic_rotate %122 by %c255_i32_69 dim 1 : vector<4x256xf32>, i32 -> vector<4x256xf32>
    %cst_70 = arith.constant 0.000000e+00 : f32
    %129 = vector.shape_cast %24 : vector<1x256xi1> to vector<1x256xi1>
    %130 = vector.broadcast %129 : vector<1x256xi1> to vector<4x256xi1>
    %131 = vector.broadcast %cst_70 : f32 to vector<4x256xf32>
    %132 = arith.select %130, %128, %131 : vector<4x256xi1>, vector<4x256xf32>
    %cst_71 = arith.constant dense<0.000000e+00> : vector<4x256xf32>
    %133 = tpu.matmul %35, %127, %cst_71 {dimension_numbers = #tpu.dot_dimension_numbers<[1], [0], [0], [1], [0, 0, 1, 1], [], []>} : vector<4x4xf32>, vector<4x256xf32>, vector<4x256xf32> -> vector<4x256xf32>
    %cst_72 = arith.constant dense<0.000000e+00> : vector<4x256xf32>
    %134 = tpu.matmul %37, %122, %cst_72 {dimension_numbers = #tpu.dot_dimension_numbers<[1], [0], [0], [1], [0, 0, 1, 1], [], []>} : vector<4x4xf32>, vector<4x256xf32>, vector<4x256xf32> -> vector<4x256xf32>
    %135 = arith.addf %133, %134 : vector<4x256xf32>
    %cst_73 = arith.constant dense<0.000000e+00> : vector<4x256xf32>
    %136 = tpu.matmul %39, %132, %cst_73 {dimension_numbers = #tpu.dot_dimension_numbers<[1], [0], [0], [1], [0, 0, 1, 1], [], []>} : vector<4x4xf32>, vector<4x256xf32>, vector<4x256xf32> -> vector<4x256xf32>
    %137 = arith.addf %135, %136 : vector<4x256xf32>
    %138 = vector.broadcast %40 : vector<4x1xf32> to vector<4x256xf32>
    %139 = arith.addf %137, %138 : vector<4x256xf32>
    %cst_74 = arith.constant 0.000000e+00 : f32
    %140 = vector.broadcast %cst_74 : f32 to vector<4x256xf32>
    %141 = arith.maximumf %139, %140 : vector<4x256xf32>
    %cst_75 = arith.constant dense<0.000000e+00> : vector<16x256xf32>
    %142 = tpu.matmul %41, %141, %cst_75 {dimension_numbers = #tpu.dot_dimension_numbers<[1], [0], [0], [1], [0, 0, 1, 1], [], []>} : vector<16x4xf32>, vector<4x256xf32>, vector<16x256xf32> -> vector<16x256xf32>
    %143 = vector.broadcast %42 : vector<16x1xf32> to vector<16x256xf32>
    %144 = arith.addf %142, %143 : vector<16x256xf32>
    %145 = arith.index_cast %c1_i32_54 : i32 to index
    %c0_76 = arith.constant 0 : index
    %c0_77 = arith.constant 0 : index
    %146 = vector.load %arg10[%145, %c0_76, %c0_77] : memref<4x16x256xf32, #tpu.memory_space<vmem>>, vector<1x16x256xf32>
    %147 = vector.shape_cast %146 : vector<1x16x256xf32> to vector<16x256xf32>
    %148 = vector.shape_cast %144 : vector<16x256xf32> to vector<1x16x256xf32>
    tpu.vector_store %arg10[%145, %c0_76, %c0_77], %148 {strides = array<i32>} : memref<4x16x256xf32, #tpu.memory_space<vmem>>, vector<1x16x256xf32>,
    %c2_i32 = arith.constant 2 : i32
    %149 = arith.index_cast %c2_i32 : i32 to index
    %c0_78 = arith.constant 0 : index
    %c0_79 = arith.constant 0 : index
    %150 = vector.load %arg1[%149, %c0_78, %c0_79] : memref<4x4x256xf32, #tpu.memory_space<vmem>>, vector<1x4x256xf32>
    %151 = vector.shape_cast %150 : vector<1x4x256xf32> to vector<4x256xf32>
    %cst_80 = arith.constant dense<0.000000e+00> : vector<4x256xf32>
    %152 = tpu.matmul %25, %151, %cst_80 {dimension_numbers = #tpu.dot_dimension_numbers<[1], [0], [0], [1], [0, 0, 1, 1], [], []>} : vector<4x4xf32>, vector<4x256xf32>, vector<4x256xf32> -> vector<4x256xf32>
    %153 = vector.broadcast %26 : vector<4x1xf32> to vector<4x256xf32>
    %154 = arith.addf %152, %153 : vector<4x256xf32>
    %cst_81 = arith.constant 0.000000e+00 : f32
    %155 = vector.broadcast %cst_81 : f32 to vector<4x256xf32>
    %156 = arith.maximumf %154, %155 : vector<4x256xf32>
    %c16_i32_82 = arith.constant 16 : i32
    %157 = tpu.dynamic_rotate %156 by %c16_i32_82 dim 1 : vector<4x256xf32>, i32 -> vector<4x256xf32>
    %cst_83 = arith.constant 0.000000e+00 : f32
    %158 = vector.shape_cast %18 : vector<1x256xi1> to vector<1x256xi1>
    %159 = vector.broadcast %158 : vector<1x256xi1> to vector<4x256xi1>
    %160 = vector.broadcast %cst_83 : f32 to vector<4x256xf32>
    %161 = arith.select %159, %157, %160 : vector<4x256xi1>, vector<4x256xf32>
    %c240_i32_84 = arith.constant 240 : i32
    %162 = tpu.dynamic_rotate %156 by %c240_i32_84 dim 1 : vector<4x256xf32>, i32 -> vector<4x256xf32>
    %cst_85 = arith.constant 0.000000e+00 : f32
    %163 = vector.shape_cast %20 : vector<1x256xi1> to vector<1x256xi1>
    %164 = vector.broadcast %163 : vector<1x256xi1> to vector<4x256xi1>
    %165 = vector.broadcast %cst_85 : f32 to vector<4x256xf32>
    %166 = arith.select %164, %162, %165 : vector<4x256xi1>, vector<4x256xf32>
    %cst_86 = arith.constant dense<0.000000e+00> : vector<4x256xf32>
    %167 = tpu.matmul %28, %161, %cst_86 {dimension_numbers = #tpu.dot_dimension_numbers<[1], [0], [0], [1], [0, 0, 1, 1], [], []>} : vector<4x4xf32>, vector<4x256xf32>, vector<4x256xf32> -> vector<4x256xf32>
    %cst_87 = arith.constant dense<0.000000e+00> : vector<4x256xf32>
    %168 = tpu.matmul %30, %156, %cst_87 {dimension_numbers = #tpu.dot_dimension_numbers<[1], [0], [0], [1], [0, 0, 1, 1], [], []>} : vector<4x4xf32>, vector<4x256xf32>, vector<4x256xf32> -> vector<4x256xf32>
    %169 = arith.addf %167, %168 : vector<4x256xf32>
    %cst_88 = arith.constant dense<0.000000e+00> : vector<4x256xf32>
    %170 = tpu.matmul %32, %166, %cst_88 {dimension_numbers = #tpu.dot_dimension_numbers<[1], [0], [0], [1], [0, 0, 1, 1], [], []>} : vector<4x4xf32>, vector<4x256xf32>, vector<4x256xf32> -> vector<4x256xf32>
    %171 = arith.addf %169, %170 : vector<4x256xf32>
    %172 = vector.broadcast %33 : vector<4x1xf32> to vector<4x256xf32>
    %173 = arith.addf %171, %172 : vector<4x256xf32>
    %cst_89 = arith.constant 0.000000e+00 : f32
    %174 = vector.broadcast %cst_89 : f32 to vector<4x256xf32>
    %175 = arith.maximumf %173, %174 : vector<4x256xf32>
    %c1_i32_90 = arith.constant 1 : i32
    %176 = tpu.dynamic_rotate %175 by %c1_i32_90 dim 1 : vector<4x256xf32>, i32 -> vector<4x256xf32>
    %cst_91 = arith.constant 0.000000e+00 : f32
    %177 = vector.shape_cast %22 : vector<1x256xi1> to vector<1x256xi1>
    %178 = vector.broadcast %177 : vector<1x256xi1> to vector<4x256xi1>
    %179 = vector.broadcast %cst_91 : f32 to vector<4x256xf32>
    %180 = arith.select %178, %176, %179 : vector<4x256xi1>, vector<4x256xf32>
    %c255_i32_92 = arith.constant 255 : i32
    %181 = tpu.dynamic_rotate %175 by %c255_i32_92 dim 1 : vector<4x256xf32>, i32 -> vector<4x256xf32>
    %cst_93 = arith.constant 0.000000e+00 : f32
    %182 = vector.shape_cast %24 : vector<1x256xi1> to vector<1x256xi1>
    %183 = vector.broadcast %182 : vector<1x256xi1> to vector<4x256xi1>
    %184 = vector.broadcast %cst_93 : f32 to vector<4x256xf32>
    %185 = arith.select %183, %181, %184 : vector<4x256xi1>, vector<4x256xf32>
    %cst_94 = arith.constant dense<0.000000e+00> : vector<4x256xf32>
    %186 = tpu.matmul %35, %180, %cst_94 {dimension_numbers = #tpu.dot_dimension_numbers<[1], [0], [0], [1], [0, 0, 1, 1], [], []>} : vector<4x4xf32>, vector<4x256xf32>, vector<4x256xf32> -> vector<4x256xf32>
    %cst_95 = arith.constant dense<0.000000e+00> : vector<4x256xf32>
    %187 = tpu.matmul %37, %175, %cst_95 {dimension_numbers = #tpu.dot_dimension_numbers<[1], [0], [0], [1], [0, 0, 1, 1], [], []>} : vector<4x4xf32>, vector<4x256xf32>, vector<4x256xf32> -> vector<4x256xf32>
    %188 = arith.addf %186, %187 : vector<4x256xf32>
    %cst_96 = arith.constant dense<0.000000e+00> : vector<4x256xf32>
    %189 = tpu.matmul %39, %185, %cst_96 {dimension_numbers = #tpu.dot_dimension_numbers<[1], [0], [0], [1], [0, 0, 1, 1], [], []>} : vector<4x4xf32>, vector<4x256xf32>, vector<4x256xf32> -> vector<4x256xf32>
    %190 = arith.addf %188, %189 : vector<4x256xf32>
    %191 = vector.broadcast %40 : vector<4x1xf32> to vector<4x256xf32>
    %192 = arith.addf %190, %191 : vector<4x256xf32>
    %cst_97 = arith.constant 0.000000e+00 : f32
    %193 = vector.broadcast %cst_97 : f32 to vector<4x256xf32>
    %194 = arith.maximumf %192, %193 : vector<4x256xf32>
    %cst_98 = arith.constant dense<0.000000e+00> : vector<16x256xf32>
    %195 = tpu.matmul %41, %194, %cst_98 {dimension_numbers = #tpu.dot_dimension_numbers<[1], [0], [0], [1], [0, 0, 1, 1], [], []>} : vector<16x4xf32>, vector<4x256xf32>, vector<16x256xf32> -> vector<16x256xf32>
    %196 = vector.broadcast %42 : vector<16x1xf32> to vector<16x256xf32>
    %197 = arith.addf %195, %196 : vector<16x256xf32>
    %198 = arith.index_cast %c2_i32 : i32 to index
    %c0_99 = arith.constant 0 : index
    %c0_100 = arith.constant 0 : index
    %199 = vector.load %arg10[%198, %c0_99, %c0_100] : memref<4x16x256xf32, #tpu.memory_space<vmem>>, vector<1x16x256xf32>
    %200 = vector.shape_cast %199 : vector<1x16x256xf32> to vector<16x256xf32>
    %201 = vector.shape_cast %197 : vector<16x256xf32> to vector<1x16x256xf32>
    tpu.vector_store %arg10[%198, %c0_99, %c0_100], %201 {strides = array<i32>} : memref<4x16x256xf32, #tpu.memory_space<vmem>>, vector<1x16x256xf32>,
    %c3_i32 = arith.constant 3 : i32
    %202 = arith.index_cast %c3_i32 : i32 to index
    %c0_101 = arith.constant 0 : index
    %c0_102 = arith.constant 0 : index
    %203 = vector.load %arg1[%202, %c0_101, %c0_102] : memref<4x4x256xf32, #tpu.memory_space<vmem>>, vector<1x4x256xf32>
    %204 = vector.shape_cast %203 : vector<1x4x256xf32> to vector<4x256xf32>
    %cst_103 = arith.constant dense<0.000000e+00> : vector<4x256xf32>
    %205 = tpu.matmul %25, %204, %cst_103 {dimension_numbers = #tpu.dot_dimension_numbers<[1], [0], [0], [1], [0, 0, 1, 1], [], []>} : vector<4x4xf32>, vector<4x256xf32>, vector<4x256xf32> -> vector<4x256xf32>
    %206 = vector.broadcast %26 : vector<4x1xf32> to vector<4x256xf32>
    %207 = arith.addf %205, %206 : vector<4x256xf32>
    %cst_104 = arith.constant 0.000000e+00 : f32
    %208 = vector.broadcast %cst_104 : f32 to vector<4x256xf32>
    %209 = arith.maximumf %207, %208 : vector<4x256xf32>
    %c16_i32_105 = arith.constant 16 : i32
    %210 = tpu.dynamic_rotate %209 by %c16_i32_105 dim 1 : vector<4x256xf32>, i32 -> vector<4x256xf32>
    %cst_106 = arith.constant 0.000000e+00 : f32
    %211 = vector.shape_cast %18 : vector<1x256xi1> to vector<1x256xi1>
    %212 = vector.broadcast %211 : vector<1x256xi1> to vector<4x256xi1>
    %213 = vector.broadcast %cst_106 : f32 to vector<4x256xf32>
    %214 = arith.select %212, %210, %213 : vector<4x256xi1>, vector<4x256xf32>
    %c240_i32_107 = arith.constant 240 : i32
    %215 = tpu.dynamic_rotate %209 by %c240_i32_107 dim 1 : vector<4x256xf32>, i32 -> vector<4x256xf32>
    %cst_108 = arith.constant 0.000000e+00 : f32
    %216 = vector.shape_cast %20 : vector<1x256xi1> to vector<1x256xi1>
    %217 = vector.broadcast %216 : vector<1x256xi1> to vector<4x256xi1>
    %218 = vector.broadcast %cst_108 : f32 to vector<4x256xf32>
    %219 = arith.select %217, %215, %218 : vector<4x256xi1>, vector<4x256xf32>
    %cst_109 = arith.constant dense<0.000000e+00> : vector<4x256xf32>
    %220 = tpu.matmul %28, %214, %cst_109 {dimension_numbers = #tpu.dot_dimension_numbers<[1], [0], [0], [1], [0, 0, 1, 1], [], []>} : vector<4x4xf32>, vector<4x256xf32>, vector<4x256xf32> -> vector<4x256xf32>
    %cst_110 = arith.constant dense<0.000000e+00> : vector<4x256xf32>
    %221 = tpu.matmul %30, %209, %cst_110 {dimension_numbers = #tpu.dot_dimension_numbers<[1], [0], [0], [1], [0, 0, 1, 1], [], []>} : vector<4x4xf32>, vector<4x256xf32>, vector<4x256xf32> -> vector<4x256xf32>
    %222 = arith.addf %220, %221 : vector<4x256xf32>
    %cst_111 = arith.constant dense<0.000000e+00> : vector<4x256xf32>
    %223 = tpu.matmul %32, %219, %cst_111 {dimension_numbers = #tpu.dot_dimension_numbers<[1], [0], [0], [1], [0, 0, 1, 1], [], []>} : vector<4x4xf32>, vector<4x256xf32>, vector<4x256xf32> -> vector<4x256xf32>
    %224 = arith.addf %222, %223 : vector<4x256xf32>
    %225 = vector.broadcast %33 : vector<4x1xf32> to vector<4x256xf32>
    %226 = arith.addf %224, %225 : vector<4x256xf32>
    %cst_112 = arith.constant 0.000000e+00 : f32
    %227 = vector.broadcast %cst_112 : f32 to vector<4x256xf32>
    %228 = arith.maximumf %226, %227 : vector<4x256xf32>
    %c1_i32_113 = arith.constant 1 : i32
    %229 = tpu.dynamic_rotate %228 by %c1_i32_113 dim 1 : vector<4x256xf32>, i32 -> vector<4x256xf32>
    %cst_114 = arith.constant 0.000000e+00 : f32
    %230 = vector.shape_cast %22 : vector<1x256xi1> to vector<1x256xi1>
    %231 = vector.broadcast %230 : vector<1x256xi1> to vector<4x256xi1>
    %232 = vector.broadcast %cst_114 : f32 to vector<4x256xf32>
    %233 = arith.select %231, %229, %232 : vector<4x256xi1>, vector<4x256xf32>
    %c255_i32_115 = arith.constant 255 : i32
    %234 = tpu.dynamic_rotate %228 by %c255_i32_115 dim 1 : vector<4x256xf32>, i32 -> vector<4x256xf32>
    %cst_116 = arith.constant 0.000000e+00 : f32
    %235 = vector.shape_cast %24 : vector<1x256xi1> to vector<1x256xi1>
    %236 = vector.broadcast %235 : vector<1x256xi1> to vector<4x256xi1>
    %237 = vector.broadcast %cst_116 : f32 to vector<4x256xf32>
    %238 = arith.select %236, %234, %237 : vector<4x256xi1>, vector<4x256xf32>
    %cst_117 = arith.constant dense<0.000000e+00> : vector<4x256xf32>
    %239 = tpu.matmul %35, %233, %cst_117 {dimension_numbers = #tpu.dot_dimension_numbers<[1], [0], [0], [1], [0, 0, 1, 1], [], []>} : vector<4x4xf32>, vector<4x256xf32>, vector<4x256xf32> -> vector<4x256xf32>
    %cst_118 = arith.constant dense<0.000000e+00> : vector<4x256xf32>
    %240 = tpu.matmul %37, %228, %cst_118 {dimension_numbers = #tpu.dot_dimension_numbers<[1], [0], [0], [1], [0, 0, 1, 1], [], []>} : vector<4x4xf32>, vector<4x256xf32>, vector<4x256xf32> -> vector<4x256xf32>
    %241 = arith.addf %239, %240 : vector<4x256xf32>
    %cst_119 = arith.constant dense<0.000000e+00> : vector<4x256xf32>
    %242 = tpu.matmul %39, %238, %cst_119 {dimension_numbers = #tpu.dot_dimension_numbers<[1], [0], [0], [1], [0, 0, 1, 1], [], []>} : vector<4x4xf32>, vector<4x256xf32>, vector<4x256xf32> -> vector<4x256xf32>
    %243 = arith.addf %241, %242 : vector<4x256xf32>
    %244 = vector.broadcast %40 : vector<4x1xf32> to vector<4x256xf32>
    %245 = arith.addf %243, %244 : vector<4x256xf32>
    %cst_120 = arith.constant 0.000000e+00 : f32
    %246 = vector.broadcast %cst_120 : f32 to vector<4x256xf32>
    %247 = arith.maximumf %245, %246 : vector<4x256xf32>
    %cst_121 = arith.constant dense<0.000000e+00> : vector<16x256xf32>
    %248 = tpu.matmul %41, %247, %cst_121 {dimension_numbers = #tpu.dot_dimension_numbers<[1], [0], [0], [1], [0, 0, 1, 1], [], []>} : vector<16x4xf32>, vector<4x256xf32>, vector<16x256xf32> -> vector<16x256xf32>
    %249 = vector.broadcast %42 : vector<16x1xf32> to vector<16x256xf32>
    %250 = arith.addf %248, %249 : vector<16x256xf32>
    %251 = arith.index_cast %c3_i32 : i32 to index
    %c0_122 = arith.constant 0 : index
    %c0_123 = arith.constant 0 : index
    %252 = vector.load %arg10[%251, %c0_122, %c0_123] : memref<4x16x256xf32, #tpu.memory_space<vmem>>, vector<1x16x256xf32>
    %253 = vector.shape_cast %252 : vector<1x16x256xf32> to vector<16x256xf32>
    %254 = vector.shape_cast %250 : vector<16x256xf32> to vector<1x16x256xf32>
    tpu.vector_store %arg10[%251, %c0_122, %c0_123], %254 {strides = array<i32>} : memref<4x16x256xf32, #tpu.memory_space<vmem>>, vector<1x16x256xf32>,
    %c4_i32 = arith.constant 4 : i32
    return
  }
  func.func @transform_0(%arg0: i32) -> (i32, i32, i32) {
    %c0_i32 = arith.constant 0 : i32
    %c0_i32_0 = arith.constant 0 : i32
    %c0_i32_1 = arith.constant 0 : i32
    return %arg0, %c0_i32, %c0_i32_0 : i32, i32, i32
  }
  func.func @transform_1(%arg0: i32) -> (i32, i32) {
    %c0_i32 = arith.constant 0 : i32
    %c0_i32_0 = arith.constant 0 : i32
    %c0_i32_1 = arith.constant 0 : i32
    return %c0_i32, %c0_i32_0 : i32, i32
  }
  func.func @transform_2(%arg0: i32) -> (i32, i32) {
    %c0_i32 = arith.constant 0 : i32
    %c0_i32_0 = arith.constant 0 : i32
    %c0_i32_1 = arith.constant 0 : i32
    return %c0_i32, %c0_i32_0 : i32, i32
  }
  func.func @transform_3(%arg0: i32) -> (i32, i32, i32) {
    %c0_i32 = arith.constant 0 : i32
    %c0_i32_0 = arith.constant 0 : i32
    %c0_i32_1 = arith.constant 0 : i32
    %c0_i32_2 = arith.constant 0 : i32
    return %c0_i32, %c0_i32_0, %c0_i32_1 : i32, i32, i32
  }
  func.func @transform_4(%arg0: i32) -> (i32, i32) {
    %c0_i32 = arith.constant 0 : i32
    %c0_i32_0 = arith.constant 0 : i32
    %c0_i32_1 = arith.constant 0 : i32
    return %c0_i32, %c0_i32_0 : i32, i32
  }
  func.func @transform_5(%arg0: i32) -> (i32, i32, i32) {
    %c0_i32 = arith.constant 0 : i32
    %c0_i32_0 = arith.constant 0 : i32
    %c0_i32_1 = arith.constant 0 : i32
    %c0_i32_2 = arith.constant 0 : i32
    return %c0_i32, %c0_i32_0, %c0_i32_1 : i32, i32, i32
  }
  func.func @transform_6(%arg0: i32) -> (i32, i32) {
    %c0_i32 = arith.constant 0 : i32
    %c0_i32_0 = arith.constant 0 : i32
    %c0_i32_1 = arith.constant 0 : i32
    return %c0_i32, %c0_i32_0 : i32, i32
  }
  func.func @transform_7(%arg0: i32) -> (i32, i32) {
    %c0_i32 = arith.constant 0 : i32
    %c0_i32_0 = arith.constant 0 : i32
    %c0_i32_1 = arith.constant 0 : i32
    return %c0_i32, %c0_i32_0 : i32, i32
  }
  func.func @transform_8(%arg0: i32) -> (i32, i32) {
    %c0_i32 = arith.constant 0 : i32
    %c0_i32_0 = arith.constant 0 : i32
    %c0_i32_1 = arith.constant 0 : i32
    return %c0_i32, %c0_i32_0 : i32, i32
  }
  func.func @transform_9(%arg0: i32) -> (i32, i32, i32) {
    %c0_i32 = arith.constant 0 : i32
    %c0_i32_0 = arith.constant 0 : i32
    %c0_i32_1 = arith.constant 0 : i32
    return %arg0, %c0_i32, %c0_i32_0 : i32, i32, i32
  }
}

</mosaic_0001>

<llo_original>
// kernel: tpu_custom_call.1
$region0: #{tpu_custom_call.1}
  #allocation0 [shape = 'u32[]', space=smem, size = 0x4, offset = 0x4, fixed_abs, tag = 'smem constant byte address 0x4 - core index']
  #allocation1 [shape = 'u32[72,128]{1,0:T(1,128)}', space=vmem, size = 0x9000, scoped, tag = 'internal scratch']
  %s0 = inlined_call_operand.hbm [shape: f32[8,4,256], index: 0, kind: input, shape index: {}]
  %s1 = inlined_call_operand.vmem [shape: f32[4,4], index: 1, kind: input, shape index: {}]
  %s2 = inlined_call_operand.vmem [shape: f32[4,1], index: 2, kind: input, shape index: {}]
  %s3 = inlined_call_operand.vmem [shape: f32[3,4,4], index: 3, kind: input, shape index: {}]
  %s4 = inlined_call_operand.vmem [shape: f32[4,1], index: 4, kind: input, shape index: {}]
  %s5 = inlined_call_operand.vmem [shape: f32[3,4,4], index: 5, kind: input, shape index: {}]
  %s6 = inlined_call_operand.vmem [shape: f32[4,1], index: 6, kind: input, shape index: {}]
  %s7 = inlined_call_operand.vmem [shape: f32[16,4], index: 7, kind: input, shape index: {}]
  %s8 = inlined_call_operand.vmem [shape: f32[16,1], index: 8, kind: input, shape index: {}]
  %s9 = inlined_call_operand.hbm [shape: f32[8,16,256], index: 9, kind: output, shape index: {}]
  %s10 = sld [smem:[#allocation0]]
  $region73: #{tpu_custom_call.1} parent=0
    _
  %s12 = ssub.s32 1, %s10
  %s13 = scalar_select 0, %s12, %s10
  $region1: #{tpu_custom_call.1} parent=0
    #allocation2 [shape = 'u8[32768]{0}', space=vmem, size = 0x8000, scoped, tag = 'input window, operand 0']
    #allocation3 [shape = 's32[2]{0}', space=sflag, size = 0x8, scoped, tag = 'scoped memory for tpu_custom_call.1']
    #allocation4 [shape = 's32[2]{0}', space=sflag, size = 0x8, scoped, tag = 'scoped memory for tpu_custom_call.1']
    #allocation5 [shape = 'u8[131072]{0}', space=vmem, size = 0x20000, scoped, tag = 'output window, operand 0']
    %14 = vsyncpa [#allocation3], 0
    %s15 = scalar_lea.sflag [#allocation3], 1
    %16 = vsyncpa %s15, 0
    %17 = vsyncpa [#allocation4], 0
    %s18 = scalar_lea.sflag [#allocation4], 1
    %19 = vsyncpa %s18, 0
    loop: start=0, step=1, limit=4
    $region2: #{tpu_custom_call.1} parent=1 // loop_pre_header
      _
    $region3: #{tpu_custom_call.1} parent=1 // loop_header
      %s21 = sphi 0, %s25
      %p22 = scmp.ge.s32.totalorder %s21, 4
      %s31 = sphi 0, %s33
      %s34 = sphi 0, %s31
      %s35 = sphi 0, %s34
      %s51 = sphi 0, %s35
      %s55 = sphi 0, %s55
      %s57 = sphi 0, %s55
      %s58 = sphi 0, %s57
      %s72 = sphi 0, %s58
      %s76 = sphi 0, %s76
      %s78 = sphi 0, %s76
      %s79 = sphi 0, %s78
      %s93 = sphi 0, %s79
      %s97 = sphi 0, %s97
      %s99 = sphi 0, %s97
      %s100 = sphi 0, %s99
      %s114 = sphi 0, %s100
      %s118 = sphi 0, %s118
      %s120 = sphi 0, %s118
      %s121 = sphi 0, %s120
      %s135 = sphi 0, %s121
      %s139 = sphi 0, %s139
      %s141 = sphi 0, %s139
      %s142 = sphi 0, %s141
      %s156 = sphi 0, %s142
      %s160 = sphi 0, %s160
      %s162 = sphi 0, %s160
      %s163 = sphi 0, %s162
      %s177 = sphi 0, %s163
      %s181 = sphi 0, %s181
      %s183 = sphi 0, %s181
      %s184 = sphi 0, %s183
      %s198 = sphi 0, %s184
      %s202 = sphi 0, %s202
      %s204 = sphi 0, %s202
      %s205 = sphi 0, %s204
      %s219 = sphi 0, %s205
      %s225 = sphi 0, %s227
      %s228 = sphi 0, %s225
      %s229 = sphi 0, %s228
      %s245 = sphi 0, %s229
    $region4: #{tpu_custom_call.1} parent=1 // loop_header_branch
      %24 = sbr.rel (%p22) target = $region8
    $region5: #{tpu_custom_call.1} parent=1 // loop_body
      %s26 = ssub.s32 %s21, 1
      %s27 = ssub.s32 %s21, 2
      %s28 = sadd.s32 %s21, 1
      %s29 = ssub.s32 %s21, %s28
      %p30 = scmp.eq.s32.totalorder %s29, 0
      %s32 = sadd.s32 %s31, 1
      %s33 = scalar_select %p30, %s31, %s32
      %p36 = pneg %p30
      %p37 = scmp.eq.s32.totalorder %s21, 1
      %p38 = por %p36, %p37
      %p39 = scmp.ne.s32.totalorder %s31, %s34
      %p40 = scmp.eq.s32.totalorder %s21, 0
      %p41 = por %p39, %p40
      %p42 = scmp.ne.s32.totalorder %s31, %s34
      %p43 = scmp.eq.s32.totalorder %s26, 1
      %p44 = por %p42, %p43
      %p45 = scmp.ne.s32.totalorder %s34, %s35
      %p46 = scmp.eq.s32.totalorder %s26, 0
      %p47 = por %p45, %p46
      %p48 = scmp.ne.s32.totalorder %s34, %s35
      %p49 = scmp.eq.s32.totalorder %s27, 1
      %p50 = por %p48, %p49
      %p52 = scmp.ne.s32.totalorder %s35, %s51
      %p53 = scmp.eq.s32.totalorder %s27, 0
      %p54 = por %p52, %p53
      %s56 = sadd.s32 %s55, 1
      %p59 = scmp.eq.s32.totalorder %s21, 1
      %p60 = scmp.ne.s32.totalorder %s55, %s57
      %p61 = scmp.eq.s32.totalorder %s21, 0
      %p62 = por %p60, %p61
      %p63 = scmp.ne.s32.totalorder %s55, %s57
      %p64 = scmp.eq.s32.totalorder %s26, 1
      %p65 = por %p63, %p64
      %p66 = scmp.ne.s32.totalorder %s57, %s58
      %p67 = scmp.eq.s32.totalorder %s26, 0
      %p68 = por %p66, %p67
      %p69 = scmp.ne.s32.totalorder %s57, %s58
      %p70 = scmp.eq.s32.totalorder %s27, 1
      %p71 = por %p69, %p70
      %p73 = scmp.ne.s32.totalorder %s58, %s72
      %p74 = scmp.eq.s32.totalorder %s27, 0
      %p75 = por %p73, %p74
      %s77 = sadd.s32 %s76, 1
      %p80 = scmp.eq.s32.totalorder %s21, 1
      %p81 = scmp.ne.s32.totalorder %s76, %s78
      %p82 = scmp.eq.s32.totalorder %s21, 0
      %p83 = por %p81, %p82
      %p84 = scmp.ne.s32.totalorder %s76, %s78
      %p85 = scmp.eq.s32.totalorder %s26, 1
      %p86 = por %p84, %p85
      %p87 = scmp.ne.s32.totalorder %s78, %s79
      %p88 = scmp.eq.s32.totalorder %s26, 0
      %p89 = por %p87, %p88
      %p90 = scmp.ne.s32.totalorder %s78, %s79
      %p91 = scmp.eq.s32.totalorder %s27, 1
      %p92 = por %p90, %p91
      %p94 = scmp.ne.s32.totalorder %s79, %s93
      %p95 = scmp.eq.s32.totalorder %s27, 0
      %p96 = por %p94, %p95
      %s98 = sadd.s32 %s97, 1
      %p101 = scmp.eq.s32.totalorder %s21, 1
      %p102 = scmp.ne.s32.totalorder %s97, %s99
      %p103 = scmp.eq.s32.totalorder %s21, 0
      %p104 = por %p102, %p103
      %p105 = scmp.ne.s32.totalorder %s97, %s99
      %p106 = scmp.eq.s32.totalorder %s26, 1
      %p107 = por %p105, %p106
      %p108 = scmp.ne.s32.totalorder %s99, %s100
      %p109 = scmp.eq.s32.totalorder %s26, 0
      %p110 = por %p108, %p109
      %p111 = scmp.ne.s32.totalorder %s99, %s100
      %p112 = scmp.eq.s32.totalorder %s27, 1
      %p113 = por %p111, %p112
      %p115 = scmp.ne.s32.totalorder %s100, %s114
      %p116 = scmp.eq.s32.totalorder %s27, 0
      %p117 = por %p115, %p116
      %s119 = sadd.s32 %s118, 1
      %p122 = scmp.eq.s32.totalorder %s21, 1
      %p123 = scmp.ne.s32.totalorder %s118, %s120
      %p124 = scmp.eq.s32.totalorder %s21, 0
      %p125 = por %p123, %p124
      %p126 = scmp.ne.s32.totalorder %s118, %s120
      %p127 = scmp.eq.s32.totalorder %s26, 1
      %p128 = por %p126, %p127
      %p129 = scmp.ne.s32.totalorder %s120, %s121
      %p130 = scmp.eq.s32.totalorder %s26, 0
      %p131 = por %p129, %p130
      %p132 = scmp.ne.s32.totalorder %s120, %s121
      %p133 = scmp.eq.s32.totalorder %s27, 1
      %p134 = por %p132, %p133
      %p136 = scmp.ne.s32.totalorder %s121, %s135
      %p137 = scmp.eq.s32.totalorder %s27, 0
      %p138 = por %p136, %p137
      %s140 = sadd.s32 %s139, 1
      %p143 = scmp.eq.s32.totalorder %s21, 1
      %p144 = scmp.ne.s32.totalorder %s139, %s141
      %p145 = scmp.eq.s32.totalorder %s21, 0
      %p146 = por %p144, %p145
      %p147 = scmp.ne.s32.totalorder %s139, %s141
      %p148 = scmp.eq.s32.totalorder %s26, 1
      %p149 = por %p147, %p148
      %p150 = scmp.ne.s32.totalorder %s141, %s142
      %p151 = scmp.eq.s32.totalorder %s26, 0
      %p152 = por %p150, %p151
      %p153 = scmp.ne.s32.totalorder %s141, %s142
      %p154 = scmp.eq.s32.totalorder %s27, 1
      %p155 = por %p153, %p154
      %p157 = scmp.ne.s32.totalorder %s142, %s156
      %p158 = scmp.eq.s32.totalorder %s27, 0
      %p159 = por %p157, %p158
      %s161 = sadd.s32 %s160, 1
      %p164 = scmp.eq.s32.totalorder %s21, 1
      %p165 = scmp.ne.s32.totalorder %s160, %s162
      %p166 = scmp.eq.s32.totalorder %s21, 0
      %p167 = por %p165, %p166
      %p168 = scmp.ne.s32.totalorder %s160, %s162
      %p169 = scmp.eq.s32.totalorder %s26, 1
      %p170 = por %p168, %p169
      %p171 = scmp.ne.s32.totalorder %s162, %s163
      %p172 = scmp.eq.s32.totalorder %s26, 0
      %p173 = por %p171, %p172
      %p174 = scmp.ne.s32.totalorder %s162, %s163
      %p175 = scmp.eq.s32.totalorder %s27, 1
      %p176 = por %p174, %p175
      %p178 = scmp.ne.s32.totalorder %s163, %s177
      %p179 = scmp.eq.s32.totalorder %s27, 0
      %p180 = por %p178, %p179
      %s182 = sadd.s32 %s181, 1
      %p185 = scmp.eq.s32.totalorder %s21, 1
      %p186 = scmp.ne.s32.totalorder %s181, %s183
      %p187 = scmp.eq.s32.totalorder %s21, 0
      %p188 = por %p186, %p187
      %p189 = scmp.ne.s32.totalorder %s181, %s183
      %p190 = scmp.eq.s32.totalorder %s26, 1
      %p191 = por %p189, %p190
      %p192 = scmp.ne.s32.totalorder %s183, %s184
      %p193 = scmp.eq.s32.totalorder %s26, 0
      %p194 = por %p192, %p193
      %p195 = scmp.ne.s32.totalorder %s183, %s184
      %p196 = scmp.eq.s32.totalorder %s27, 1
      %p197 = por %p195, %p196
      %p199 = scmp.ne.s32.totalorder %s184, %s198
      %p200 = scmp.eq.s32.totalorder %s27, 0
      %p201 = por %p199, %p200
      %s203 = sadd.s32 %s202, 1
      %p206 = scmp.eq.s32.totalorder %s21, 1
      %p207 = scmp.ne.s32.totalorder %s202, %s204
      %p208 = scmp.eq.s32.totalorder %s21, 0
      %p209 = por %p207, %p208
      %p210 = scmp.ne.s32.totalorder %s202, %s204
      %p211 = scmp.eq.s32.totalorder %s26, 1
      %p212 = por %p210, %p211
      %p213 = scmp.ne.s32.totalorder %s204, %s205
      %p214 = scmp.eq.s32.totalorder %s26, 0
      %p215 = por %p213, %p214
      %p216 = scmp.ne.s32.totalorder %s204, %s205
      %p217 = scmp.eq.s32.totalorder %s27, 1
      %p218 = por %p216, %p217
      %p220 = scmp.ne.s32.totalorder %s205, %s219
      %p221 = scmp.eq.s32.totalorder %s27, 0
      %p222 = por %p220, %p221
      %s223 = ssub.s32 %s21, %s28
      %p224 = scmp.eq.s32.totalorder %s223, 0
      %s226 = sadd.s32 %s225, 1
      %s227 = scalar_select %p224, %s225, %s226
      %p230 = pneg %p224
      %p231 = scmp.eq.s32.totalorder %s21, 1
      %p232 = por %p230, %p231
      %p233 = scmp.ne.s32.totalorder %s225, %s228
      %p234 = scmp.eq.s32.totalorder %s21, 0
      %p235 = por %p233, %p234
      %p236 = scmp.ne.s32.totalorder %s225, %s228
      %p237 = scmp.eq.s32.totalorder %s26, 1
      %p238 = por %p236, %p237
      %p239 = scmp.ne.s32.totalorder %s228, %s229
      %p240 = scmp.eq.s32.totalorder %s26, 0
      %p241 = por %p239, %p240
      %p242 = scmp.ne.s32.totalorder %s228, %s229
      %p243 = scmp.eq.s32.totalorder %s27, 1
      %p244 = por %p242, %p243
      %p246 = scmp.ne.s32.totalorder %s229, %s245
      %p247 = scmp.eq.s32.totalorder %s27, 0
      %p248 = por %p246, %p247
      %p249 = scmp.le.s32.totalorder 1, %s21
      %p250 = scmp.lt.s32.totalorder %s21, 3
      %p251 = pnand %p249, %p250
      %p252 = pneg %p251
      // Predicated region
      $region9: #{tpu_custom_call.1} parent=5 // pred_check
        _
      $region10: #{tpu_custom_call.1} parent=5 // pred_check_branch
        %254 = sbr.rel (%p251) target = $region12
      $region11: #{tpu_custom_call.1} parent=5 // pred_region
        %s255 = ssub.s32 %s21, 1
        // Predicated region
        $region13: #{tpu_custom_call.1} parent=11 // pred_check
          %p256 = pneg %p68
        $region14: #{tpu_custom_call.1} parent=11 // pred_check_branch
          %258 = sbr.rel (%p256) target = $region16
        $region15: #{tpu_custom_call.1} parent=11 // pred_region
          _
        $region16: #{tpu_custom_call.1} parent=11 // pred_fallthru
          _
        // Predicated region
        $region17: #{tpu_custom_call.1} parent=11 // pred_check
          %p259 = pneg %p89
        $region18: #{tpu_custom_call.1} parent=11 // pred_check_branch
          %261 = sbr.rel (%p259) target = $region20
        $region19: #{tpu_custom_call.1} parent=11 // pred_region
          _
        $region20: #{tpu_custom_call.1} parent=11 // pred_fallthru
          _
        // Predicated region
        $region21: #{tpu_custom_call.1} parent=11 // pred_check
          %p262 = pneg %p110
        $region22: #{tpu_custom_call.1} parent=11 // pred_check_branch
          %264 = sbr.rel (%p262) target = $region24
        $region23: #{tpu_custom_call.1} parent=11 // pred_region
          _
        $region24: #{tpu_custom_call.1} parent=11 // pred_fallthru
          _
        // Predicated region
        $region25: #{tpu_custom_call.1} parent=11 // pred_check
          %p265 = pneg %p131
        $region26: #{tpu_custom_call.1} parent=11 // pred_check_branch
          %267 = sbr.rel (%p265) target = $region28
        $region27: #{tpu_custom_call.1} parent=11 // pred_region
          _
        $region28: #{tpu_custom_call.1} parent=11 // pred_fallthru
          _
        // Predicated region
        $region29: #{tpu_custom_call.1} parent=11 // pred_check
          %p268 = pneg %p152
        $region30: #{tpu_custom_call.1} parent=11 // pred_check_branch
          %270 = sbr.rel (%p268) target = $region32
        $region31: #{tpu_custom_call.1} parent=11 // pred_region
          _
        $region32: #{tpu_custom_call.1} parent=11 // pred_fallthru
          _
        // Predicated region
        $region33: #{tpu_custom_call.1} parent=11 // pred_check
          %p271 = pneg %p173
        $region34: #{tpu_custom_call.1} parent=11 // pred_check_branch
          %273 = sbr.rel (%p271) target = $region36
        $region35: #{tpu_custom_call.1} parent=11 // pred_region
          _
        $region36: #{tpu_custom_call.1} parent=11 // pred_fallthru
          _
        // Predicated region
        $region37: #{tpu_custom_call.1} parent=11 // pred_check
          %p274 = pneg %p194
        $region38: #{tpu_custom_call.1} parent=11 // pred_check_branch
          %276 = sbr.rel (%p274) target = $region40
        $region39: #{tpu_custom_call.1} parent=11 // pred_region
          _
        $region40: #{tpu_custom_call.1} parent=11 // pred_fallthru
          _
        // Predicated region
        $region41: #{tpu_custom_call.1} parent=11 // pred_check
          %p277 = pneg %p215
        $region42: #{tpu_custom_call.1} parent=11 // pred_check_branch
          %279 = sbr.rel (%p277) target = $region44
        $region43: #{tpu_custom_call.1} parent=11 // pred_region
          _
        $region44: #{tpu_custom_call.1} parent=11 // pred_fallthru
          _
      $region12: #{tpu_custom_call.1} parent=5 // pred_fallthru
        _
      %p280 = scmp.lt.s32.totalorder %s21, 2
      // Predicated region
      $region45: #{tpu_custom_call.1} parent=5 // pred_check
        %p281 = pneg %p280
      $region46: #{tpu_custom_call.1} parent=5 // pred_check_branch
        %283 = sbr.rel (%p281) target = $region48
      $region47: #{tpu_custom_call.1} parent=5 // pred_region
        // Predicated region
        $region49: #{tpu_custom_call.1} parent=47 // pred_check
          %p284 = pneg %p41
        $region50: #{tpu_custom_call.1} parent=47 // pred_check_branch
          %286 = sbr.rel (%p284) target = $region52
        $region51: #{tpu_custom_call.1} parent=47 // pred_region
          %s287 = sand.u32 %s31, 1
          %s288 = scalar_lea.sflag [#allocation3], %s287
          %s289 = sand.u32 %s31, 1
          %s290 = smul.addr %s289, 32
          %s291 = scalar_lea.vmem [#allocation2], %s290
          %s292 = smul.u32 4, %s21
          %294 = vsyncadd %s288, 0
          %s295 = smul.addr %s292, 2
          %s296 = smul.addr %s295, 4
          %s297 = scalar_lea.hbm %s0, %s296
          %s298 = sshll.u32 %s297, 4
          %s299 = int_to_ptr.hbm [resolvable:$true] %s298
          %s300 = sshll.u32 %s291, 4
          %s301 = int_to_ptr.vmem [resolvable:$true] %s300
          %306 = dma.hbm_to_vmem [thread:$0]  %s299, 512, %s301, %s288, 128, 128, 8
        $region52: #{tpu_custom_call.1} parent=47 // pred_fallthru
          _
      $region48: #{tpu_custom_call.1} parent=5 // pred_fallthru
        _
      %p307 = scmp.le.s32.totalorder 1, %s21
      %p308 = scmp.lt.s32.totalorder %s21, 3
      %p309 = pnand %p307, %p308
      %p310 = pneg %p309
      // Predicated region
      $region53: #{tpu_custom_call.1} parent=5 // pred_check
        _
      $region54: #{tpu_custom_call.1} parent=5 // pred_check_branch
        %312 = sbr.rel (%p309) target = $region56
      $region55: #{tpu_custom_call.1} parent=5 // pred_region
        %s313 = ssub.s32 %s21, 1
        %s314 = sand.u32 %s34, 1
        %s315 = scalar_lea.sflag [#allocation3], %s314
        %s316 = sand.u32 %s34, 1
        %s317 = smul.addr %s316, 32
        %s318 = scalar_lea.vmem [#allocation2], %s317
        // Predicated region
        $region57: #{tpu_custom_call.1} parent=55 // pred_check
          %p319 = pneg %p47
        $region58: #{tpu_custom_call.1} parent=55 // pred_check_branch
          %321 = sbr.rel (%p319) target = $region60
        $region59: #{tpu_custom_call.1} parent=55 // pred_region
          %323 = dma.done %s315, 512
        $region60: #{tpu_custom_call.1} parent=55 // pred_fallthru
          _
        %s324 = sand.u32 %s34, 1
        %s325 = scalar_lea.sflag [#allocation3], %s324
        %s326 = sand.u32 %s34, 1
        %s327 = smul.addr %s326, 32
        %s328 = scalar_lea.vmem [#allocation2], %s327
        %p329 = pneg %p47
        %p330 = pneg %p44
        %p331 = pneg %p68
        %p332 = pneg %p65
        %p333 = pneg %p89
        %p334 = pneg %p86
        %p335 = pneg %p110
        %p336 = pneg %p107
        %p337 = pneg %p131
        %p338 = pneg %p128
        %p339 = pneg %p152
        %p340 = pneg %p149
        %p341 = pneg %p173
        %p342 = pneg %p170
        %p343 = pneg %p194
        %p344 = pneg %p191
        %p345 = pneg %p215
        %p346 = pneg %p212
        %p347 = pneg %p241
        %p348 = pneg %p238
        %s349 = sand.u32 %s228, 1
        %s350 = scalar_lea.sflag [#allocation4], %s349
        %s351 = sand.u32 %s228, 1
        %s352 = smul.addr %s351, 128
        %s353 = scalar_lea.vmem [#allocation5], %s352
        %s354 = smul.u32 4, %s26
        %s355 = smul.u32 4, %s26
        %v356 = vlaneseq
        %v357 = vand.u32 %v356, 127
        %v358 = vadd.s32 %v357, 128
        %vm359 = vcmp.lt.s32.totalorder %v357, 0
        %v360 = vsub.s32 0, %v357
        %v361 = vsel %vm359, %v360, %v357
        %v362 = vshrl.u32 %v361, 4
        %v363 = vand.u32 %v361, 15
        %v364 = vsub.s32 0, %v363
        %v365 = vsel %vm359, %v364, %v363
        %vm366 = vcmp.lt.s32.totalorder %v358, 0
        %v367 = vsub.s32 0, %v358
        %v368 = vsel %vm366, %v367, %v358
        %v369 = vshrl.u32 %v368, 4
        %v370 = vand.u32 %v368, 15
        %v371 = vsub.s32 0, %v370
        %v372 = vsel %vm366, %v371, %v370
        %vm373 = vcmp.ne.s32.totalorder %v365, 0
        %vm374 = vcmp.ne.s32.totalorder %v372, 0
        %vm375 = vcmp.lt.s32.totalorder %v365, 0
        %vm376 = vcmp.lt.s32.totalorder %v372, 0
        %vm377 = vmand %vm375, %vm373
        %vm378 = vmand %vm376, %vm374
        %v379 = vadd.s32 %v365, 16
        %v380 = vadd.s32 %v372, 16
        %v381 = vsel %vm377, %v379, %v365
        %v382 = vsel %vm378, %v380, %v372
        %vm383 = vcmp.ge.s32.totalorder %v357, 16
        %vm384 = vcmp.ge.s32.totalorder %v358, 16
        %vm385 = vcmp.lt.s32.totalorder %v357, 240
        %vm386 = vcmp.lt.s32.totalorder %v358, 240
        %vm387 = vcmp.ge.s32.totalorder %v381, 1
        %vm388 = vcmp.ge.s32.totalorder %v382, 1
        %vm389 = vcmp.lt.s32.totalorder %v381, 15
        %vm390 = vcmp.lt.s32.totalorder %v382, 15
        %v391 = vld [vmem:[%s1] sm:$0xf]
        %v392 = vld [vmem:[%s2] sm:$0xf]
        %v393 = vld [vmem:[%s3] sm:$0xf]
        %s394 = scalar_lea.vmem %s3, 4
        %v395 = vld [vmem:[%s394] sm:$0xf]
        %s396 = scalar_lea.vmem %s3, 8
        %v397 = vld [vmem:[%s396] sm:$0xf]
        %v398 = vld [vmem:[%s4] sm:$0xf]
        %v399 = vld [vmem:[%s5] sm:$0xf]
        %s400 = scalar_lea.vmem %s5, 4
        %v401 = vld [vmem:[%s400] sm:$0xf]
        %s402 = scalar_lea.vmem %s5, 8
        %v403 = vld [vmem:[%s402] sm:$0xf]
        %v404 = vld [vmem:[%s6] sm:$0xf]
        %v405 = vld [vmem:[%s7] sm:$0xff]
        %v406 = vld [vmem:[%s7 + $0x8] sm:$0xff]
        %v407 = vld [vmem:[%s8] sm:$0xff]
        %v408 = vld [vmem:[%s8 + $0x8] sm:$0xff]
        %v409 = vld [vmem:[%s318] sm:$0xff]
        %411 = vset.pattern.permute.xlu0 0
        %412 = vperm.xlu0 %411, %v392
        %v413 = vpop.permute.xlu0 %412
        %416 = vst [vmem:[#allocation1] ss:$2 sm:$0xff] %v409
        %v417 = vld.sshfl [vmem:[#allocation1] sm:$0xff pattern:$0x75316420]
        %v418 = vld.sshfl [vmem:[#allocation1 + $0x8] sm:$0xff pattern:$0x75316420]
        %vm419 = vcmask 31744
        %v421 = vsel %vm419, %v391, 0
        %vm423 = vcmask 1043456
        %v424 = vsel %vm423, %v417, 0
        %v426 = vsel %vm423, %v418, 0
        %428 = vmatpush.msra.mxu0 0.0
        %429 = vmatpush.msra.mxu0 0.0
        %430 = vmatpush.msra.mxu0 0.0
        %431 = vmatpush.msra.mxu0 0.0
        %432 = vmatpush.msra.mxu0 0.0
        %433 = vmatpush.msra.mxu0 0.0
        %434 = vmatpush.msra.mxu0 0.0
        %435 = vmatpush.msra.mxu0 0.0
        %436 = vmatpush.msra.mxu0 0.0
        %437 = vmatpush.msra.mxu0 0.0
        %438 = vmatpush.msra.mxu0 0.0
        %439 = vmatpush.msra.mxu0 0.0
        %440 = vmatpush.msra.mxu0 0.0
        %441 = vmatpush.msra.mxu0 0.0
        %442 = vmatpush.msra.mxu0 0.0
        %443 = vmatpush.msra.mxu0 %v424
        %444 = vmatmul.f32.gmra.mxu0 %v421
        %v445 = vpop.f32.mrf.mxu0
        %v446 = vadd.f32 %v413, %v445
        %447 = vdwg.mxu0
        %448 = vmatpush.msra.mxu0 0.0
        %449 = vmatpush.msra.mxu0 0.0
        %450 = vmatpush.msra.mxu0 0.0
        %451 = vmatpush.msra.mxu0 0.0
        %452 = vmatpush.msra.mxu0 0.0
        %453 = vmatpush.msra.mxu0 0.0
        %454 = vmatpush.msra.mxu0 0.0
        %455 = vmatpush.msra.mxu0 0.0
        %456 = vmatpush.msra.mxu0 0.0
        %457 = vmatpush.msra.mxu0 0.0
        %458 = vmatpush.msra.mxu0 0.0
        %459 = vmatpush.msra.mxu0 0.0
        %460 = vmatpush.msra.mxu0 0.0
        %461 = vmatpush.msra.mxu0 0.0
        %462 = vmatpush.msra.mxu0 0.0
        %463 = vmatpush.msra.mxu0 %v426
        %464 = vmatmul.f32.gmra.mxu0 %v421
        %v465 = vpop.f32.mrf.mxu0
        %v466 = vadd.f32 %v413, %v465
        %467 = vdwg.mxu0
        %v468 = vmax.f32 %v446, 0.0
        %v469 = vmax.f32 %v466, 0.0
        %470 = vrot.lane.b32.xlu0 %v468, 16
        %v471 = vpop.permute.xlu0 %470
        %472 = vrot.lane.b32.xlu0 %v469, 16
        %v473 = vpop.permute.xlu0 %472
        %vm474 = vcmp.lt.s32.totalorder %v357, 16
        %v475 = vsel %vm474, %v471, %v473
        %v476 = vsel %vm474, %v473, %v471
        %v477 = vsel %vm383, 1, 0
        %v478 = vsel %vm384, 1, 0
        %vm479 = vcmp.eq.s32.totalorder %v477, 1
        %vm480 = vcmp.eq.s32.totalorder %v478, 1
        %v481 = vsel %vm479, %v476, 0.0
        %v482 = vsel %vm480, %v475, 0.0
        %483 = vrot.lane.b32.xlu0 %v468, 112
        %v484 = vpop.permute.xlu0 %483
        %485 = vrot.lane.b32.xlu0 %v469, 112
        %v486 = vpop.permute.xlu0 %485
        %vm487 = vcmp.lt.s32.totalorder %v357, 112
        %v488 = vsel %vm487, %v484, %v486
        %v489 = vsel %vm487, %v486, %v484
        %v490 = vsel %vm385, 1, 0
        %v491 = vsel %vm386, 1, 0
        %vm492 = vcmp.eq.s32.totalorder %v490, 1
        %vm493 = vcmp.eq.s32.totalorder %v491, 1
        %v494 = vsel %vm492, %v488, 0.0
        %v495 = vsel %vm493, %v489, 0.0
        %v497 = vsel %vm419, %v395, 0
        %v500 = vsel %vm423, %v468, 0
        %v503 = vsel %vm423, %v469, 0
        %505 = vmatpush.msra.mxu0 0.0
        %506 = vmatpush.msra.mxu0 0.0
        %507 = vmatpush.msra.mxu0 0.0
        %508 = vmatpush.msra.mxu0 0.0
        %509 = vmatpush.msra.mxu0 0.0
        %510 = vmatpush.msra.mxu0 0.0
        %511 = vmatpush.msra.mxu0 0.0
        %512 = vmatpush.msra.mxu0 0.0
        %513 = vmatpush.msra.mxu0 0.0
        %514 = vmatpush.msra.mxu0 0.0
        %515 = vmatpush.msra.mxu0 0.0
        %516 = vmatpush.msra.mxu0 0.0
        %517 = vmatpush.msra.mxu0 0.0
        %518 = vmatpush.msra.mxu0 0.0
        %519 = vmatpush.msra.mxu0 0.0
        %520 = vmatpush.msra.mxu0 %v500
        %521 = vmatmul.f32.gmra.mxu0 %v497
        %v522 = vpop.f32.mrf.mxu0
        %v523 = vadd.f32 0.0, %v522
        %524 = vdwg.mxu0
        %525 = vmatpush.msra.mxu0 0.0
        %526 = vmatpush.msra.mxu0 0.0
        %527 = vmatpush.msra.mxu0 0.0
        %528 = vmatpush.msra.mxu0 0.0
        %529 = vmatpush.msra.mxu0 0.0
        %530 = vmatpush.msra.mxu0 0.0
        %531 = vmatpush.msra.mxu0 0.0
        %532 = vmatpush.msra.mxu0 0.0
        %533 = vmatpush.msra.mxu0 0.0
        %534 = vmatpush.msra.mxu0 0.0
        %535 = vmatpush.msra.mxu0 0.0
        %536 = vmatpush.msra.mxu0 0.0
        %537 = vmatpush.msra.mxu0 0.0
        %538 = vmatpush.msra.mxu0 0.0
        %539 = vmatpush.msra.mxu0 0.0
        %540 = vmatpush.msra.mxu0 %v503
        %541 = vmatmul.f32.gmra.mxu0 %v497
        %v542 = vpop.f32.mrf.mxu0
        %v543 = vadd.f32 0.0, %v542
        %544 = vdwg.mxu0
        %v546 = vsel %vm419, %v393, 0
        %v549 = vsel %vm423, %v481, 0
        %v552 = vsel %vm423, %v482, 0
        %554 = vmatpush.msra.mxu0 0.0
        %555 = vmatpush.msra.mxu0 0.0
        %556 = vmatpush.msra.mxu0 0.0
        %557 = vmatpush.msra.mxu0 0.0
        %558 = vmatpush.msra.mxu0 0.0
        %559 = vmatpush.msra.mxu0 0.0
        %560 = vmatpush.msra.mxu0 0.0
        %561 = vmatpush.msra.mxu0 0.0
        %562 = vmatpush.msra.mxu0 0.0
        %563 = vmatpush.msra.mxu0 0.0
        %564 = vmatpush.msra.mxu0 0.0
        %565 = vmatpush.msra.mxu0 0.0
        %566 = vmatpush.msra.mxu0 0.0
        %567 = vmatpush.msra.mxu0 0.0
        %568 = vmatpush.msra.mxu0 0.0
        %569 = vmatpush.msra.mxu0 %v549
        %570 = vmatmul.f32.gmra.mxu0 %v546
        %v571 = vpop.f32.mrf.mxu0
        %v572 = vadd.f32 %v523, %v571
        %573 = vdwg.mxu0
        %574 = vmatpush.msra.mxu0 0.0
        %575 = vmatpush.msra.mxu0 0.0
        %576 = vmatpush.msra.mxu0 0.0
        %577 = vmatpush.msra.mxu0 0.0
        %578 = vmatpush.msra.mxu0 0.0
        %579 = vmatpush.msra.mxu0 0.0
        %580 = vmatpush.msra.mxu0 0.0
        %581 = vmatpush.msra.mxu0 0.0
        %582 = vmatpush.msra.mxu0 0.0
        %583 = vmatpush.msra.mxu0 0.0
        %584 = vmatpush.msra.mxu0 0.0
        %585 = vmatpush.msra.mxu0 0.0
        %586 = vmatpush.msra.mxu0 0.0
        %587 = vmatpush.msra.mxu0 0.0
        %588 = vmatpush.msra.mxu0 0.0
        %589 = vmatpush.msra.mxu0 %v552
        %590 = vmatmul.f32.gmra.mxu0 %v546
        %v591 = vpop.f32.mrf.mxu0
        %v592 = vadd.f32 %v543, %v591
        %593 = vdwg.mxu0
        %v595 = vsel %vm419, %v397, 0
        %v598 = vsel %vm423, %v494, 0
        %v601 = vsel %vm423, %v495, 0
        %603 = vmatpush.msra.mxu0 0.0
        %604 = vmatpush.msra.mxu0 0.0
        %605 = vmatpush.msra.mxu0 0.0
        %606 = vmatpush.msra.mxu0 0.0
        %607 = vmatpush.msra.mxu0 0.0
        %608 = vmatpush.msra.mxu0 0.0
        %609 = vmatpush.msra.mxu0 0.0
        %610 = vmatpush.msra.mxu0 0.0
        %611 = vmatpush.msra.mxu0 0.0
        %612 = vmatpush.msra.mxu0 0.0
        %613 = vmatpush.msra.mxu0 0.0
        %614 = vmatpush.msra.mxu0 0.0
        %615 = vmatpush.msra.mxu0 0.0
        %616 = vmatpush.msra.mxu0 0.0
        %617 = vmatpush.msra.mxu0 0.0
        %618 = vmatpush.msra.mxu0 %v598
        %619 = vmatmul.f32.gmra.mxu0 %v595
        %v620 = vpop.f32.mrf.mxu0
        %v621 = vadd.f32 0.0, %v620
        %622 = vdwg.mxu0
        %623 = vmatpush.msra.mxu0 0.0
        %624 = vmatpush.msra.mxu0 0.0
        %625 = vmatpush.msra.mxu0 0.0
        %626 = vmatpush.msra.mxu0 0.0
        %627 = vmatpush.msra.mxu0 0.0
        %628 = vmatpush.msra.mxu0 0.0
        %629 = vmatpush.msra.mxu0 0.0
        %630 = vmatpush.msra.mxu0 0.0
        %631 = vmatpush.msra.mxu0 0.0
        %632 = vmatpush.msra.mxu0 0.0
        %633 = vmatpush.msra.mxu0 0.0
        %634 = vmatpush.msra.mxu0 0.0
        %635 = vmatpush.msra.mxu0 0.0
        %636 = vmatpush.msra.mxu0 0.0
        %637 = vmatpush.msra.mxu0 0.0
        %638 = vmatpush.msra.mxu0 %v601
        %639 = vmatmul.f32.gmra.mxu0 %v595
        %v640 = vpop.f32.mrf.mxu0
        %v641 = vadd.f32 0.0, %v640
        %642 = vdwg.mxu0
        %v643 = vadd.f32 %v572, %v621
        %v644 = vadd.f32 %v592, %v641
        %646 = vset.pattern.permute.xlu0 0
        %647 = vperm.xlu0 %646, %v398
        %v648 = vpop.permute.xlu0 %647
        %v650 = vadd.f32 %v643, %v648
        %v651 = vadd.f32 %v644, %v648
        %v652 = vmax.f32 %v650, 0.0
        %v653 = vmax.f32 %v651, 0.0
        %654 = vrot.lane.b32.xlu0 %v652, 1
        %v655 = vpop.permute.xlu0 %654
        %656 = vrot.lane.b32.xlu0 %v653, 1
        %v657 = vpop.permute.xlu0 %656
        %vm658 = vcmp.lt.s32.totalorder %v357, 1
        %v659 = vsel %vm658, %v655, %v657
        %v660 = vsel %vm658, %v657, %v655
        %v661 = vsel %vm387, 1, 0
        %v662 = vsel %vm388, 1, 0
        %vm663 = vcmp.eq.s32.totalorder %v661, 1
        %vm664 = vcmp.eq.s32.totalorder %v662, 1
        %v665 = vsel %vm663, %v660, 0.0
        %v666 = vsel %vm664, %v659, 0.0
        %667 = vrot.lane.b32.xlu0 %v652, 127
        %v668 = vpop.permute.xlu0 %667
        %669 = vrot.lane.b32.xlu0 %v653, 127
        %v670 = vpop.permute.xlu0 %669
        %vm671 = vcmp.lt.s32.totalorder %v357, 127
        %v672 = vsel %vm671, %v668, %v670
        %v673 = vsel %vm671, %v670, %v668
        %v674 = vsel %vm389, 1, 0
        %v675 = vsel %vm390, 1, 0
        %vm676 = vcmp.eq.s32.totalorder %v674, 1
        %vm677 = vcmp.eq.s32.totalorder %v675, 1
        %v678 = vsel %vm676, %v672, 0.0
        %v679 = vsel %vm677, %v673, 0.0
        %v681 = vsel %vm419, %v401, 0
        %v684 = vsel %vm423, %v652, 0
        %v687 = vsel %vm423, %v653, 0
        %689 = vmatpush.msra.mxu0 0.0
        %690 = vmatpush.msra.mxu0 0.0
        %691 = vmatpush.msra.mxu0 0.0
        %692 = vmatpush.msra.mxu0 0.0
        %693 = vmatpush.msra.mxu0 0.0
        %694 = vmatpush.msra.mxu0 0.0
        %695 = vmatpush.msra.mxu0 0.0
        %696 = vmatpush.msra.mxu0 0.0
        %697 = vmatpush.msra.mxu0 0.0
        %698 = vmatpush.msra.mxu0 0.0
        %699 = vmatpush.msra.mxu0 0.0
        %700 = vmatpush.msra.mxu0 0.0
        %701 = vmatpush.msra.mxu0 0.0
        %702 = vmatpush.msra.mxu0 0.0
        %703 = vmatpush.msra.mxu0 0.0
        %704 = vmatpush.msra.mxu0 %v684
        %705 = vmatmul.f32.gmra.mxu0 %v681
        %v706 = vpop.f32.mrf.mxu0
        %v707 = vadd.f32 0.0, %v706
        %708 = vdwg.mxu0
        %709 = vmatpush.msra.mxu0 0.0
        %710 = vmatpush.msra.mxu0 0.0
        %711 = vmatpush.msra.mxu0 0.0
        %712 = vmatpush.msra.mxu0 0.0
        %713 = vmatpush.msra.mxu0 0.0
        %714 = vmatpush.msra.mxu0 0.0
        %715 = vmatpush.msra.mxu0 0.0
        %716 = vmatpush.msra.mxu0 0.0
        %717 = vmatpush.msra.mxu0 0.0
        %718 = vmatpush.msra.mxu0 0.0
        %719 = vmatpush.msra.mxu0 0.0
        %720 = vmatpush.msra.mxu0 0.0
        %721 = vmatpush.msra.mxu0 0.0
        %722 = vmatpush.msra.mxu0 0.0
        %723 = vmatpush.msra.mxu0 0.0
        %724 = vmatpush.msra.mxu0 %v687
        %725 = vmatmul.f32.gmra.mxu0 %v681
        %v726 = vpop.f32.mrf.mxu0
        %v727 = vadd.f32 0.0, %v726
        %728 = vdwg.mxu0
        %v730 = vsel %vm419, %v399, 0
        %v733 = vsel %vm423, %v665, 0
        %v736 = vsel %vm423, %v666, 0
        %738 = vmatpush.msra.mxu0 0.0
        %739 = vmatpush.msra.mxu0 0.0
        %740 = vmatpush.msra.mxu0 0.0
        %741 = vmatpush.msra.mxu0 0.0
        %742 = vmatpush.msra.mxu0 0.0
        %743 = vmatpush.msra.mxu0 0.0
        %744 = vmatpush.msra.mxu0 0.0
        %745 = vmatpush.msra.mxu0 0.0
        %746 = vmatpush.msra.mxu0 0.0
        %747 = vmatpush.msra.mxu0 0.0
        %748 = vmatpush.msra.mxu0 0.0
        %749 = vmatpush.msra.mxu0 0.0
        %750 = vmatpush.msra.mxu0 0.0
        %751 = vmatpush.msra.mxu0 0.0
        %752 = vmatpush.msra.mxu0 0.0
        %753 = vmatpush.msra.mxu0 %v733
        %754 = vmatmul.f32.gmra.mxu0 %v730
        %v755 = vpop.f32.mrf.mxu0
        %v756 = vadd.f32 %v707, %v755
        %757 = vdwg.mxu0
        %758 = vmatpush.msra.mxu0 0.0
        %759 = vmatpush.msra.mxu0 0.0
        %760 = vmatpush.msra.mxu0 0.0
        %761 = vmatpush.msra.mxu0 0.0
        %762 = vmatpush.msra.mxu0 0.0
        %763 = vmatpush.msra.mxu0 0.0
        %764 = vmatpush.msra.mxu0 0.0
        %765 = vmatpush.msra.mxu0 0.0
        %766 = vmatpush.msra.mxu0 0.0
        %767 = vmatpush.msra.mxu0 0.0
        %768 = vmatpush.msra.mxu0 0.0
        %769 = vmatpush.msra.mxu0 0.0
        %770 = vmatpush.msra.mxu0 0.0
        %771 = vmatpush.msra.mxu0 0.0
        %772 = vmatpush.msra.mxu0 0.0
        %773 = vmatpush.msra.mxu0 %v736
        %774 = vmatmul.f32.gmra.mxu0 %v730
        %v775 = vpop.f32.mrf.mxu0
        %v776 = vadd.f32 %v727, %v775
        %777 = vdwg.mxu0
        %v779 = vsel %vm419, %v403, 0
        %v782 = vsel %vm423, %v678, 0
        %v785 = vsel %vm423, %v679, 0
        %787 = vmatpush.msra.mxu0 0.0
        %788 = vmatpush.msra.mxu0 0.0
        %789 = vmatpush.msra.mxu0 0.0
        %790 = vmatpush.msra.mxu0 0.0
        %791 = vmatpush.msra.mxu0 0.0
        %792 = vmatpush.msra.mxu0 0.0
        %793 = vmatpush.msra.mxu0 0.0
        %794 = vmatpush.msra.mxu0 0.0
        %795 = vmatpush.msra.mxu0 0.0
        %796 = vmatpush.msra.mxu0 0.0
        %797 = vmatpush.msra.mxu0 0.0
        %798 = vmatpush.msra.mxu0 0.0
        %799 = vmatpush.msra.mxu0 0.0
        %800 = vmatpush.msra.mxu0 0.0
        %801 = vmatpush.msra.mxu0 0.0
        %802 = vmatpush.msra.mxu0 %v782
        %803 = vmatmul.f32.gmra.mxu0 %v779
        %v804 = vpop.f32.mrf.mxu0
        %v805 = vadd.f32 0.0, %v804
        %806 = vdwg.mxu0
        %807 = vmatpush.msra.mxu0 0.0
        %808 = vmatpush.msra.mxu0 0.0
        %809 = vmatpush.msra.mxu0 0.0
        %810 = vmatpush.msra.mxu0 0.0
        %811 = vmatpush.msra.mxu0 0.0
        %812 = vmatpush.msra.mxu0 0.0
        %813 = vmatpush.msra.mxu0 0.0
        %814 = vmatpush.msra.mxu0 0.0
        %815 = vmatpush.msra.mxu0 0.0
        %816 = vmatpush.msra.mxu0 0.0
        %817 = vmatpush.msra.mxu0 0.0
        %818 = vmatpush.msra.mxu0 0.0
        %819 = vmatpush.msra.mxu0 0.0
        %820 = vmatpush.msra.mxu0 0.0
        %821 = vmatpush.msra.mxu0 0.0
        %822 = vmatpush.msra.mxu0 %v785
        %823 = vmatmul.f32.gmra.mxu0 %v779
        %v824 = vpop.f32.mrf.mxu0
        %v825 = vadd.f32 0.0, %v824
        %826 = vdwg.mxu0
        %v827 = vadd.f32 %v756, %v805
        %v828 = vadd.f32 %v776, %v825
        %830 = vset.pattern.permute.xlu0 0
        %831 = vperm.xlu0 %830, %v404
        %v832 = vpop.permute.xlu0 %831
        %v834 = vadd.f32 %v827, %v832
        %v835 = vadd.f32 %v828, %v832
        %v836 = vmax.f32 %v834, 0.0
        %v837 = vmax.f32 %v835, 0.0
        %839 = vset.pattern.permute.xlu0 0
        %840 = vperm.xlu0 %839, %v407
        %v841 = vpop.permute.xlu0 %840
        %844 = vset.pattern.permute.xlu0 0
        %845 = vperm.xlu0 %844, %v408
        %v846 = vpop.permute.xlu0 %845
        %v849 = vsel %vm419, %v405, 0
        %v852 = vsel %vm419, %v406, 0
        %v855 = vsel %vm423, %v836, 0
        %v858 = vsel %vm423, %v837, 0
        %860 = vmatpush.msra.mxu0 0.0
        %861 = vmatpush.msra.mxu0 0.0
        %862 = vmatpush.msra.mxu0 0.0
        %863 = vmatpush.msra.mxu0 0.0
        %864 = vmatpush.msra.mxu0 0.0
        %865 = vmatpush.msra.mxu0 0.0
        %866 = vmatpush.msra.mxu0 0.0
        %867 = vmatpush.msra.mxu0 0.0
        %868 = vmatpush.msra.mxu0 0.0
        %869 = vmatpush.msra.mxu0 0.0
        %870 = vmatpush.msra.mxu0 0.0
        %871 = vmatpush.msra.mxu0 0.0
        %872 = vmatpush.msra.mxu0 0.0
        %873 = vmatpush.msra.mxu0 0.0
        %874 = vmatpush.msra.mxu0 0.0
        %875 = vmatpush.msra.mxu0 %v855
        %876 = vmatmul.f32.gmra.mxu0 %v849
        %v877 = vpop.f32.mrf.mxu0
        %v878 = vadd.f32 %v841, %v877
        %879 = vmatmul.f32.gmra.mxu0 %v852
        %v880 = vpop.f32.mrf.mxu0
        %v881 = vadd.f32 %v846, %v880
        %882 = vdwg.mxu0
        %883 = vmatpush.msra.mxu0 0.0
        %884 = vmatpush.msra.mxu0 0.0
        %885 = vmatpush.msra.mxu0 0.0
        %886 = vmatpush.msra.mxu0 0.0
        %887 = vmatpush.msra.mxu0 0.0
        %888 = vmatpush.msra.mxu0 0.0
        %889 = vmatpush.msra.mxu0 0.0
        %890 = vmatpush.msra.mxu0 0.0
        %891 = vmatpush.msra.mxu0 0.0
        %892 = vmatpush.msra.mxu0 0.0
        %893 = vmatpush.msra.mxu0 0.0
        %894 = vmatpush.msra.mxu0 0.0
        %895 = vmatpush.msra.mxu0 0.0
        %896 = vmatpush.msra.mxu0 0.0
        %897 = vmatpush.msra.mxu0 0.0
        %898 = vmatpush.msra.mxu0 %v858
        %899 = vmatmul.f32.gmra.mxu0 %v849
        %v900 = vpop.f32.mrf.mxu0
        %v901 = vadd.f32 %v841, %v900
        %902 = vmatmul.f32.gmra.mxu0 %v852
        %v903 = vpop.f32.mrf.mxu0
        %v904 = vadd.f32 %v846, %v903
        %905 = vdwg.mxu0
        %906 = vst [vmem:[%s353] sm:$0xff] %v878
        %907 = vst [vmem:[%s353 + $0x8] sm:$0xff] %v901
        %908 = vst [vmem:[%s353 + $0x10] sm:$0xff] %v881
        %909 = vst [vmem:[%s353 + $0x18] sm:$0xff] %v904
        %s910 = scalar_lea.vmem %s318, 8 [#allocation2]
        %v911 = vld [vmem:[%s910] sm:$0xff]
        %913 = vst [vmem:[#allocation1] ss:$2 sm:$0xff] %v911
        %v914 = vld.sshfl [vmem:[#allocation1] sm:$0xff pattern:$0x75316420]
        %v915 = vld.sshfl [vmem:[#allocation1 + $0x8] sm:$0xff pattern:$0x75316420]
        %v916 = vsel %vm423, %v914, 0
        %v918 = vsel %vm423, %v915, 0
        %920 = vmatpush.msra.mxu0 0.0
        %921 = vmatpush.msra.mxu0 0.0
        %922 = vmatpush.msra.mxu0 0.0
        %923 = vmatpush.msra.mxu0 0.0
        %924 = vmatpush.msra.mxu0 0.0
        %925 = vmatpush.msra.mxu0 0.0
        %926 = vmatpush.msra.mxu0 0.0
        %927 = vmatpush.msra.mxu0 0.0
        %928 = vmatpush.msra.mxu0 0.0
        %929 = vmatpush.msra.mxu0 0.0
        %930 = vmatpush.msra.mxu0 0.0
        %931 = vmatpush.msra.mxu0 0.0
        %932 = vmatpush.msra.mxu0 0.0
        %933 = vmatpush.msra.mxu0 0.0
        %934 = vmatpush.msra.mxu0 0.0
        %935 = vmatpush.msra.mxu0 %v916
        %936 = vmatmul.f32.gmra.mxu0 %v421
        %v937 = vpop.f32.mrf.mxu0
        %v938 = vadd.f32 %v413, %v937
        %939 = vdwg.mxu0
        %940 = vmatpush.msra.mxu0 0.0
        %941 = vmatpush.msra.mxu0 0.0
        %942 = vmatpush.msra.mxu0 0.0
        %943 = vmatpush.msra.mxu0 0.0
        %944 = vmatpush.msra.mxu0 0.0
        %945 = vmatpush.msra.mxu0 0.0
        %946 = vmatpush.msra.mxu0 0.0
        %947 = vmatpush.msra.mxu0 0.0
        %948 = vmatpush.msra.mxu0 0.0
        %949 = vmatpush.msra.mxu0 0.0
        %950 = vmatpush.msra.mxu0 0.0
        %951 = vmatpush.msra.mxu0 0.0
        %952 = vmatpush.msra.mxu0 0.0
        %953 = vmatpush.msra.mxu0 0.0
        %954 = vmatpush.msra.mxu0 0.0
        %955 = vmatpush.msra.mxu0 %v918
        %956 = vmatmul.f32.gmra.mxu0 %v421
        %v957 = vpop.f32.mrf.mxu0
        %v958 = vadd.f32 %v413, %v957
        %959 = vdwg.mxu0
        %v960 = vmax.f32 %v938, 0.0
        %v961 = vmax.f32 %v958, 0.0
        %962 = vrot.lane.b32.xlu0 %v960, 16
        %v963 = vpop.permute.xlu0 %962
        %964 = vrot.lane.b32.xlu0 %v961, 16
        %v965 = vpop.permute.xlu0 %964
        %v966 = vsel %vm474, %v963, %v965
        %v967 = vsel %vm474, %v965, %v963
        %v968 = vsel %vm479, %v967, 0.0
        %v969 = vsel %vm480, %v966, 0.0
        %970 = vrot.lane.b32.xlu0 %v960, 112
        %v971 = vpop.permute.xlu0 %970
        %972 = vrot.lane.b32.xlu0 %v961, 112
        %v973 = vpop.permute.xlu0 %972
        %v974 = vsel %vm487, %v971, %v973
        %v975 = vsel %vm487, %v973, %v971
        %v976 = vsel %vm492, %v974, 0.0
        %v977 = vsel %vm493, %v975, 0.0
        %v979 = vsel %vm423, %v960, 0
        %v982 = vsel %vm423, %v961, 0
        %984 = vmatpush.msra.mxu0 0.0
        %985 = vmatpush.msra.mxu0 0.0
        %986 = vmatpush.msra.mxu0 0.0
        %987 = vmatpush.msra.mxu0 0.0
        %988 = vmatpush.msra.mxu0 0.0
        %989 = vmatpush.msra.mxu0 0.0
        %990 = vmatpush.msra.mxu0 0.0
        %991 = vmatpush.msra.mxu0 0.0
        %992 = vmatpush.msra.mxu0 0.0
        %993 = vmatpush.msra.mxu0 0.0
        %994 = vmatpush.msra.mxu0 0.0
        %995 = vmatpush.msra.mxu0 0.0
        %996 = vmatpush.msra.mxu0 0.0
        %997 = vmatpush.msra.mxu0 0.0
        %998 = vmatpush.msra.mxu0 0.0
        %999 = vmatpush.msra.mxu0 %v979
        %1000 = vmatmul.f32.gmra.mxu0 %v497
        %v1001 = vpop.f32.mrf.mxu0
        %v1002 = vadd.f32 0.0, %v1001
        %1003 = vdwg.mxu0
        %1004 = vmatpush.msra.mxu0 0.0
        %1005 = vmatpush.msra.mxu0 0.0
        %1006 = vmatpush.msra.mxu0 0.0
        %1007 = vmatpush.msra.mxu0 0.0
        %1008 = vmatpush.msra.mxu0 0.0
        %1009 = vmatpush.msra.mxu0 0.0
        %1010 = vmatpush.msra.mxu0 0.0
        %1011 = vmatpush.msra.mxu0 0.0
        %1012 = vmatpush.msra.mxu0 0.0
        %1013 = vmatpush.msra.mxu0 0.0
        %1014 = vmatpush.msra.mxu0 0.0
        %1015 = vmatpush.msra.mxu0 0.0
        %1016 = vmatpush.msra.mxu0 0.0
        %1017 = vmatpush.msra.mxu0 0.0
        %1018 = vmatpush.msra.mxu0 0.0
        %1019 = vmatpush.msra.mxu0 %v982
        %1020 = vmatmul.f32.gmra.mxu0 %v497
        %v1021 = vpop.f32.mrf.mxu0
        %v1022 = vadd.f32 0.0, %v1021
        %1023 = vdwg.mxu0
        %v1025 = vsel %vm423, %v968, 0
        %v1028 = vsel %vm423, %v969, 0
        %1030 = vmatpush.msra.mxu0 0.0
        %1031 = vmatpush.msra.mxu0 0.0
        %1032 = vmatpush.msra.mxu0 0.0
        %1033 = vmatpush.msra.mxu0 0.0
        %1034 = vmatpush.msra.mxu0 0.0
        %1035 = vmatpush.msra.mxu0 0.0
        %1036 = vmatpush.msra.mxu0 0.0
        %1037 = vmatpush.msra.mxu0 0.0
        %1038 = vmatpush.msra.mxu0 0.0
        %1039 = vmatpush.msra.mxu0 0.0
        %1040 = vmatpush.msra.mxu0 0.0
        %1041 = vmatpush.msra.mxu0 0.0
        %1042 = vmatpush.msra.mxu0 0.0
        %1043 = vmatpush.msra.mxu0 0.0
        %1044 = vmatpush.msra.mxu0 0.0
        %1045 = vmatpush.msra.mxu0 %v1025
        %1046 = vmatmul.f32.gmra.mxu0 %v546
        %v1047 = vpop.f32.mrf.mxu0
        %v1048 = vadd.f32 %v1002, %v1047
        %1049 = vdwg.mxu0
        %1050 = vmatpush.msra.mxu0 0.0
        %1051 = vmatpush.msra.mxu0 0.0
        %1052 = vmatpush.msra.mxu0 0.0
        %1053 = vmatpush.msra.mxu0 0.0
        %1054 = vmatpush.msra.mxu0 0.0
        %1055 = vmatpush.msra.mxu0 0.0
        %1056 = vmatpush.msra.mxu0 0.0
        %1057 = vmatpush.msra.mxu0 0.0
        %1058 = vmatpush.msra.mxu0 0.0
        %1059 = vmatpush.msra.mxu0 0.0
        %1060 = vmatpush.msra.mxu0 0.0
        %1061 = vmatpush.msra.mxu0 0.0
        %1062 = vmatpush.msra.mxu0 0.0
        %1063 = vmatpush.msra.mxu0 0.0
        %1064 = vmatpush.msra.mxu0 0.0
        %1065 = vmatpush.msra.mxu0 %v1028
        %1066 = vmatmul.f32.gmra.mxu0 %v546
        %v1067 = vpop.f32.mrf.mxu0
        %v1068 = vadd.f32 %v1022, %v1067
        %1069 = vdwg.mxu0
        %v1071 = vsel %vm423, %v976, 0
        %v1074 = vsel %vm423, %v977, 0
        %1076 = vmatpush.msra.mxu0 0.0
        %1077 = vmatpush.msra.mxu0 0.0
        %1078 = vmatpush.msra.mxu0 0.0
        %1079 = vmatpush.msra.mxu0 0.0
        %1080 = vmatpush.msra.mxu0 0.0
        %1081 = vmatpush.msra.mxu0 0.0
        %1082 = vmatpush.msra.mxu0 0.0
        %1083 = vmatpush.msra.mxu0 0.0
        %1084 = vmatpush.msra.mxu0 0.0
        %1085 = vmatpush.msra.mxu0 0.0
        %1086 = vmatpush.msra.mxu0 0.0
        %1087 = vmatpush.msra.mxu0 0.0
        %1088 = vmatpush.msra.mxu0 0.0
        %1089 = vmatpush.msra.mxu0 0.0
        %1090 = vmatpush.msra.mxu0 0.0
        %1091 = vmatpush.msra.mxu0 %v1071
        %1092 = vmatmul.f32.gmra.mxu0 %v595
        %v1093 = vpop.f32.mrf.mxu0
        %v1094 = vadd.f32 0.0, %v1093
        %1095 = vdwg.mxu0
        %1096 = vmatpush.msra.mxu0 0.0
        %1097 = vmatpush.msra.mxu0 0.0
        %1098 = vmatpush.msra.mxu0 0.0
        %1099 = vmatpush.msra.mxu0 0.0
        %1100 = vmatpush.msra.mxu0 0.0
        %1101 = vmatpush.msra.mxu0 0.0
        %1102 = vmatpush.msra.mxu0 0.0
        %1103 = vmatpush.msra.mxu0 0.0
        %1104 = vmatpush.msra.mxu0 0.0
        %1105 = vmatpush.msra.mxu0 0.0
        %1106 = vmatpush.msra.mxu0 0.0
        %1107 = vmatpush.msra.mxu0 0.0
        %1108 = vmatpush.msra.mxu0 0.0
        %1109 = vmatpush.msra.mxu0 0.0
        %1110 = vmatpush.msra.mxu0 0.0
        %1111 = vmatpush.msra.mxu0 %v1074
        %1112 = vmatmul.f32.gmra.mxu0 %v595
        %v1113 = vpop.f32.mrf.mxu0
        %v1114 = vadd.f32 0.0, %v1113
        %1115 = vdwg.mxu0
        %v1116 = vadd.f32 %v1048, %v1094
        %v1117 = vadd.f32 %v1068, %v1114
        %v1118 = vadd.f32 %v1116, %v648
        %v1119 = vadd.f32 %v1117, %v648
        %v1120 = vmax.f32 %v1118, 0.0
        %v1121 = vmax.f32 %v1119, 0.0
        %1122 = vrot.lane.b32.xlu0 %v1120, 1
        %v1123 = vpop.permute.xlu0 %1122
        %1124 = vrot.lane.b32.xlu0 %v1121, 1
        %v1125 = vpop.permute.xlu0 %1124
        %v1126 = vsel %vm658, %v1123, %v1125
        %v1127 = vsel %vm658, %v1125, %v1123
        %v1128 = vsel %vm663, %v1127, 0.0
        %v1129 = vsel %vm664, %v1126, 0.0
        %1130 = vrot.lane.b32.xlu0 %v1120, 127
        %v1131 = vpop.permute.xlu0 %1130
        %1132 = vrot.lane.b32.xlu0 %v1121, 127
        %v1133 = vpop.permute.xlu0 %1132
        %v1134 = vsel %vm671, %v1131, %v1133
        %v1135 = vsel %vm671, %v1133, %v1131
        %v1136 = vsel %vm676, %v1134, 0.0
        %v1137 = vsel %vm677, %v1135, 0.0
        %v1139 = vsel %vm423, %v1120, 0
        %v1142 = vsel %vm423, %v1121, 0
        %1144 = vmatpush.msra.mxu0 0.0
        %1145 = vmatpush.msra.mxu0 0.0
        %1146 = vmatpush.msra.mxu0 0.0
        %1147 = vmatpush.msra.mxu0 0.0
        %1148 = vmatpush.msra.mxu0 0.0
        %1149 = vmatpush.msra.mxu0 0.0
        %1150 = vmatpush.msra.mxu0 0.0
        %1151 = vmatpush.msra.mxu0 0.0
        %1152 = vmatpush.msra.mxu0 0.0
        %1153 = vmatpush.msra.mxu0 0.0
        %1154 = vmatpush.msra.mxu0 0.0
        %1155 = vmatpush.msra.mxu0 0.0
        %1156 = vmatpush.msra.mxu0 0.0
        %1157 = vmatpush.msra.mxu0 0.0
        %1158 = vmatpush.msra.mxu0 0.0
        %1159 = vmatpush.msra.mxu0 %v1139
        %1160 = vmatmul.f32.gmra.mxu0 %v681
        %v1161 = vpop.f32.mrf.mxu0
        %v1162 = vadd.f32 0.0, %v1161
        %1163 = vdwg.mxu0
        %1164 = vmatpush.msra.mxu0 0.0
        %1165 = vmatpush.msra.mxu0 0.0
        %1166 = vmatpush.msra.mxu0 0.0
        %1167 = vmatpush.msra.mxu0 0.0
        %1168 = vmatpush.msra.mxu0 0.0
        %1169 = vmatpush.msra.mxu0 0.0
        %1170 = vmatpush.msra.mxu0 0.0
        %1171 = vmatpush.msra.mxu0 0.0
        %1172 = vmatpush.msra.mxu0 0.0
        %1173 = vmatpush.msra.mxu0 0.0
        %1174 = vmatpush.msra.mxu0 0.0
        %1175 = vmatpush.msra.mxu0 0.0
        %1176 = vmatpush.msra.mxu0 0.0
        %1177 = vmatpush.msra.mxu0 0.0
        %1178 = vmatpush.msra.mxu0 0.0
        %1179 = vmatpush.msra.mxu0 %v1142
        %1180 = vmatmul.f32.gmra.mxu0 %v681
        %v1181 = vpop.f32.mrf.mxu0
        %v1182 = vadd.f32 0.0, %v1181
        %1183 = vdwg.mxu0
        %v1185 = vsel %vm423, %v1128, 0
        %v1188 = vsel %vm423, %v1129, 0
        %1190 = vmatpush.msra.mxu0 0.0
        %1191 = vmatpush.msra.mxu0 0.0
        %1192 = vmatpush.msra.mxu0 0.0
        %1193 = vmatpush.msra.mxu0 0.0
        %1194 = vmatpush.msra.mxu0 0.0
        %1195 = vmatpush.msra.mxu0 0.0
        %1196 = vmatpush.msra.mxu0 0.0
        %1197 = vmatpush.msra.mxu0 0.0
        %1198 = vmatpush.msra.mxu0 0.0
        %1199 = vmatpush.msra.mxu0 0.0
        %1200 = vmatpush.msra.mxu0 0.0
        %1201 = vmatpush.msra.mxu0 0.0
        %1202 = vmatpush.msra.mxu0 0.0
        %1203 = vmatpush.msra.mxu0 0.0
        %1204 = vmatpush.msra.mxu0 0.0
        %1205 = vmatpush.msra.mxu0 %v1185
        %1206 = vmatmul.f32.gmra.mxu0 %v730
        %v1207 = vpop.f32.mrf.mxu0
        %v1208 = vadd.f32 %v1162, %v1207
        %1209 = vdwg.mxu0
        %1210 = vmatpush.msra.mxu0 0.0
        %1211 = vmatpush.msra.mxu0 0.0
        %1212 = vmatpush.msra.mxu0 0.0
        %1213 = vmatpush.msra.mxu0 0.0
        %1214 = vmatpush.msra.mxu0 0.0
        %1215 = vmatpush.msra.mxu0 0.0
        %1216 = vmatpush.msra.mxu0 0.0
        %1217 = vmatpush.msra.mxu0 0.0
        %1218 = vmatpush.msra.mxu0 0.0
        %1219 = vmatpush.msra.mxu0 0.0
        %1220 = vmatpush.msra.mxu0 0.0
        %1221 = vmatpush.msra.mxu0 0.0
        %1222 = vmatpush.msra.mxu0 0.0
        %1223 = vmatpush.msra.mxu0 0.0
        %1224 = vmatpush.msra.mxu0 0.0
        %1225 = vmatpush.msra.mxu0 %v1188
        %1226 = vmatmul.f32.gmra.mxu0 %v730
        %v1227 = vpop.f32.mrf.mxu0
        %v1228 = vadd.f32 %v1182, %v1227
        %1229 = vdwg.mxu0
        %v1231 = vsel %vm423, %v1136, 0
        %v1234 = vsel %vm423, %v1137, 0
        %1236 = vmatpush.msra.mxu0 0.0
        %1237 = vmatpush.msra.mxu0 0.0
        %1238 = vmatpush.msra.mxu0 0.0
        %1239 = vmatpush.msra.mxu0 0.0
        %1240 = vmatpush.msra.mxu0 0.0
        %1241 = vmatpush.msra.mxu0 0.0
        %1242 = vmatpush.msra.mxu0 0.0
        %1243 = vmatpush.msra.mxu0 0.0
        %1244 = vmatpush.msra.mxu0 0.0
        %1245 = vmatpush.msra.mxu0 0.0
        %1246 = vmatpush.msra.mxu0 0.0
        %1247 = vmatpush.msra.mxu0 0.0
        %1248 = vmatpush.msra.mxu0 0.0
        %1249 = vmatpush.msra.mxu0 0.0
        %1250 = vmatpush.msra.mxu0 0.0
        %1251 = vmatpush.msra.mxu0 %v1231
        %1252 = vmatmul.f32.gmra.mxu0 %v779
        %v1253 = vpop.f32.mrf.mxu0
        %v1254 = vadd.f32 0.0, %v1253
        %1255 = vdwg.mxu0
        %1256 = vmatpush.msra.mxu0 0.0
        %1257 = vmatpush.msra.mxu0 0.0
        %1258 = vmatpush.msra.mxu0 0.0
        %1259 = vmatpush.msra.mxu0 0.0
        %1260 = vmatpush.msra.mxu0 0.0
        %1261 = vmatpush.msra.mxu0 0.0
        %1262 = vmatpush.msra.mxu0 0.0
        %1263 = vmatpush.msra.mxu0 0.0
        %1264 = vmatpush.msra.mxu0 0.0
        %1265 = vmatpush.msra.mxu0 0.0
        %1266 = vmatpush.msra.mxu0 0.0
        %1267 = vmatpush.msra.mxu0 0.0
        %1268 = vmatpush.msra.mxu0 0.0
        %1269 = vmatpush.msra.mxu0 0.0
        %1270 = vmatpush.msra.mxu0 0.0
        %1271 = vmatpush.msra.mxu0 %v1234
        %1272 = vmatmul.f32.gmra.mxu0 %v779
        %v1273 = vpop.f32.mrf.mxu0
        %v1274 = vadd.f32 0.0, %v1273
        %1275 = vdwg.mxu0
        %v1276 = vadd.f32 %v1208, %v1254
        %v1277 = vadd.f32 %v1228, %v1274
        %v1278 = vadd.f32 %v1276, %v832
        %v1279 = vadd.f32 %v1277, %v832
        %v1280 = vmax.f32 %v1278, 0.0
        %v1281 = vmax.f32 %v1279, 0.0
        %v1283 = vsel %vm423, %v1280, 0
        %v1286 = vsel %vm423, %v1281, 0
        %1288 = vmatpush.msra.mxu0 0.0
        %1289 = vmatpush.msra.mxu0 0.0
        %1290 = vmatpush.msra.mxu0 0.0
        %1291 = vmatpush.msra.mxu0 0.0
        %1292 = vmatpush.msra.mxu0 0.0
        %1293 = vmatpush.msra.mxu0 0.0
        %1294 = vmatpush.msra.mxu0 0.0
        %1295 = vmatpush.msra.mxu0 0.0
        %1296 = vmatpush.msra.mxu0 0.0
        %1297 = vmatpush.msra.mxu0 0.0
        %1298 = vmatpush.msra.mxu0 0.0
        %1299 = vmatpush.msra.mxu0 0.0
        %1300 = vmatpush.msra.mxu0 0.0
        %1301 = vmatpush.msra.mxu0 0.0
        %1302 = vmatpush.msra.mxu0 0.0
        %1303 = vmatpush.msra.mxu0 %v1283
        %1304 = vmatmul.f32.gmra.mxu0 %v849
        %v1305 = vpop.f32.mrf.mxu0
        %v1306 = vadd.f32 %v841, %v1305
        %1307 = vmatmul.f32.gmra.mxu0 %v852
        %v1308 = vpop.f32.mrf.mxu0
        %v1309 = vadd.f32 %v846, %v1308
        %1310 = vdwg.mxu0
        %1311 = vmatpush.msra.mxu0 0.0
        %1312 = vmatpush.msra.mxu0 0.0
        %1313 = vmatpush.msra.mxu0 0.0
        %1314 = vmatpush.msra.mxu0 0.0
        %1315 = vmatpush.msra.mxu0 0.0
        %1316 = vmatpush.msra.mxu0 0.0
        %1317 = vmatpush.msra.mxu0 0.0
        %1318 = vmatpush.msra.mxu0 0.0
        %1319 = vmatpush.msra.mxu0 0.0
        %1320 = vmatpush.msra.mxu0 0.0
        %1321 = vmatpush.msra.mxu0 0.0
        %1322 = vmatpush.msra.mxu0 0.0
        %1323 = vmatpush.msra.mxu0 0.0
        %1324 = vmatpush.msra.mxu0 0.0
        %1325 = vmatpush.msra.mxu0 0.0
        %1326 = vmatpush.msra.mxu0 %v1286
        %1327 = vmatmul.f32.gmra.mxu0 %v849
        %v1328 = vpop.f32.mrf.mxu0
        %v1329 = vadd.f32 %v841, %v1328
        %1330 = vmatmul.f32.gmra.mxu0 %v852
        %v1331 = vpop.f32.mrf.mxu0
        %v1332 = vadd.f32 %v846, %v1331
        %1333 = vdwg.mxu0
        %s1334 = scalar_lea.vmem %s353, 32 [#allocation5]
        %1335 = vst [vmem:[%s1334] sm:$0xff] %v1306
        %1336 = vst [vmem:[%s1334 + $0x8] sm:$0xff] %v1329
        %1337 = vst [vmem:[%s1334 + $0x10] sm:$0xff] %v1309
        %1338 = vst [vmem:[%s1334 + $0x18] sm:$0xff] %v1332
        %s1339 = scalar_lea.vmem %s318, 16 [#allocation2]
        %v1340 = vld [vmem:[%s1339] sm:$0xff]
        %1342 = vst [vmem:[#allocation1] ss:$2 sm:$0xff] %v1340
        %v1343 = vld.sshfl [vmem:[#allocation1] sm:$0xff pattern:$0x75316420]
        %v1344 = vld.sshfl [vmem:[#allocation1 + $0x8] sm:$0xff pattern:$0x75316420]
        %v1345 = vsel %vm423, %v1343, 0
        %v1347 = vsel %vm423, %v1344, 0
        %1349 = vmatpush.msra.mxu0 0.0
        %1350 = vmatpush.msra.mxu0 0.0
        %1351 = vmatpush.msra.mxu0 0.0
        %1352 = vmatpush.msra.mxu0 0.0
        %1353 = vmatpush.msra.mxu0 0.0
        %1354 = vmatpush.msra.mxu0 0.0
        %1355 = vmatpush.msra.mxu0 0.0
        %1356 = vmatpush.msra.mxu0 0.0
        %1357 = vmatpush.msra.mxu0 0.0
        %1358 = vmatpush.msra.mxu0 0.0
        %1359 = vmatpush.msra.mxu0 0.0
        %1360 = vmatpush.msra.mxu0 0.0
        %1361 = vmatpush.msra.mxu0 0.0
        %1362 = vmatpush.msra.mxu0 0.0
        %1363 = vmatpush.msra.mxu0 0.0
        %1364 = vmatpush.msra.mxu0 %v1345
        %1365 = vmatmul.f32.gmra.mxu0 %v421
        %v1366 = vpop.f32.mrf.mxu0
        %v1367 = vadd.f32 %v413, %v1366
        %1368 = vdwg.mxu0
        %1369 = vmatpush.msra.mxu0 0.0
        %1370 = vmatpush.msra.mxu0 0.0
        %1371 = vmatpush.msra.mxu0 0.0
        %1372 = vmatpush.msra.mxu0 0.0
        %1373 = vmatpush.msra.mxu0 0.0
        %1374 = vmatpush.msra.mxu0 0.0
        %1375 = vmatpush.msra.mxu0 0.0
        %1376 = vmatpush.msra.mxu0 0.0
        %1377 = vmatpush.msra.mxu0 0.0
        %1378 = vmatpush.msra.mxu0 0.0
        %1379 = vmatpush.msra.mxu0 0.0
        %1380 = vmatpush.msra.mxu0 0.0
        %1381 = vmatpush.msra.mxu0 0.0
        %1382 = vmatpush.msra.mxu0 0.0
        %1383 = vmatpush.msra.mxu0 0.0
        %1384 = vmatpush.msra.mxu0 %v1347
        %1385 = vmatmul.f32.gmra.mxu0 %v421
        %v1386 = vpop.f32.mrf.mxu0
        %v1387 = vadd.f32 %v413, %v1386
        %1388 = vdwg.mxu0
        %v1389 = vmax.f32 %v1367, 0.0
        %v1390 = vmax.f32 %v1387, 0.0
        %1391 = vrot.lane.b32.xlu0 %v1389, 16
        %v1392 = vpop.permute.xlu0 %1391
        %1393 = vrot.lane.b32.xlu0 %v1390, 16
        %v1394 = vpop.permute.xlu0 %1393
        %v1395 = vsel %vm474, %v1392, %v1394
        %v1396 = vsel %vm474, %v1394, %v1392
        %v1397 = vsel %vm479, %v1396, 0.0
        %v1398 = vsel %vm480, %v1395, 0.0
        %1399 = vrot.lane.b32.xlu0 %v1389, 112
        %v1400 = vpop.permute.xlu0 %1399
        %1401 = vrot.lane.b32.xlu0 %v1390, 112
        %v1402 = vpop.permute.xlu0 %1401
        %v1403 = vsel %vm487, %v1400, %v1402
        %v1404 = vsel %vm487, %v1402, %v1400
        %v1405 = vsel %vm492, %v1403, 0.0
        %v1406 = vsel %vm493, %v1404, 0.0
        %v1408 = vsel %vm423, %v1389, 0
        %v1411 = vsel %vm423, %v1390, 0
        %1413 = vmatpush.msra.mxu0 0.0
        %1414 = vmatpush.msra.mxu0 0.0
        %1415 = vmatpush.msra.mxu0 0.0
        %1416 = vmatpush.msra.mxu0 0.0
        %1417 = vmatpush.msra.mxu0 0.0
        %1418 = vmatpush.msra.mxu0 0.0
        %1419 = vmatpush.msra.mxu0 0.0
        %1420 = vmatpush.msra.mxu0 0.0
        %1421 = vmatpush.msra.mxu0 0.0
        %1422 = vmatpush.msra.mxu0 0.0
        %1423 = vmatpush.msra.mxu0 0.0
        %1424 = vmatpush.msra.mxu0 0.0
        %1425 = vmatpush.msra.mxu0 0.0
        %1426 = vmatpush.msra.mxu0 0.0
        %1427 = vmatpush.msra.mxu0 0.0
        %1428 = vmatpush.msra.mxu0 %v1408
        %1429 = vmatmul.f32.gmra.mxu0 %v497
        %v1430 = vpop.f32.mrf.mxu0
        %v1431 = vadd.f32 0.0, %v1430
        %1432 = vdwg.mxu0
        %1433 = vmatpush.msra.mxu0 0.0
        %1434 = vmatpush.msra.mxu0 0.0
        %1435 = vmatpush.msra.mxu0 0.0
        %1436 = vmatpush.msra.mxu0 0.0
        %1437 = vmatpush.msra.mxu0 0.0
        %1438 = vmatpush.msra.mxu0 0.0
        %1439 = vmatpush.msra.mxu0 0.0
        %1440 = vmatpush.msra.mxu0 0.0
        %1441 = vmatpush.msra.mxu0 0.0
        %1442 = vmatpush.msra.mxu0 0.0
        %1443 = vmatpush.msra.mxu0 0.0
        %1444 = vmatpush.msra.mxu0 0.0
        %1445 = vmatpush.msra.mxu0 0.0
        %1446 = vmatpush.msra.mxu0 0.0
        %1447 = vmatpush.msra.mxu0 0.0
        %1448 = vmatpush.msra.mxu0 %v1411
        %1449 = vmatmul.f32.gmra.mxu0 %v497
        %v1450 = vpop.f32.mrf.mxu0
        %v1451 = vadd.f32 0.0, %v1450
        %1452 = vdwg.mxu0
        %v1454 = vsel %vm423, %v1397, 0
        %v1457 = vsel %vm423, %v1398, 0
        %1459 = vmatpush.msra.mxu0 0.0
        %1460 = vmatpush.msra.mxu0 0.0
        %1461 = vmatpush.msra.mxu0 0.0
        %1462 = vmatpush.msra.mxu0 0.0
        %1463 = vmatpush.msra.mxu0 0.0
        %1464 = vmatpush.msra.mxu0 0.0
        %1465 = vmatpush.msra.mxu0 0.0
        %1466 = vmatpush.msra.mxu0 0.0
        %1467 = vmatpush.msra.mxu0 0.0
        %1468 = vmatpush.msra.mxu0 0.0
        %1469 = vmatpush.msra.mxu0 0.0
        %1470 = vmatpush.msra.mxu0 0.0
        %1471 = vmatpush.msra.mxu0 0.0
        %1472 = vmatpush.msra.mxu0 0.0
        %1473 = vmatpush.msra.mxu0 0.0
        %1474 = vmatpush.msra.mxu0 %v1454
        %1475 = vmatmul.f32.gmra.mxu0 %v546
        %v1476 = vpop.f32.mrf.mxu0
        %v1477 = vadd.f32 %v1431, %v1476
        %1478 = vdwg.mxu0
        %1479 = vmatpush.msra.mxu0 0.0
        %1480 = vmatpush.msra.mxu0 0.0
        %1481 = vmatpush.msra.mxu0 0.0
        %1482 = vmatpush.msra.mxu0 0.0
        %1483 = vmatpush.msra.mxu0 0.0
        %1484 = vmatpush.msra.mxu0 0.0
        %1485 = vmatpush.msra.mxu0 0.0
        %1486 = vmatpush.msra.mxu0 0.0
        %1487 = vmatpush.msra.mxu0 0.0
        %1488 = vmatpush.msra.mxu0 0.0
        %1489 = vmatpush.msra.mxu0 0.0
        %1490 = vmatpush.msra.mxu0 0.0
        %1491 = vmatpush.msra.mxu0 0.0
        %1492 = vmatpush.msra.mxu0 0.0
        %1493 = vmatpush.msra.mxu0 0.0
        %1494 = vmatpush.msra.mxu0 %v1457
        %1495 = vmatmul.f32.gmra.mxu0 %v546
        %v1496 = vpop.f32.mrf.mxu0
        %v1497 = vadd.f32 %v1451, %v1496
        %1498 = vdwg.mxu0
        %v1500 = vsel %vm423, %v1405, 0
        %v1503 = vsel %vm423, %v1406, 0
        %1505 = vmatpush.msra.mxu0 0.0
        %1506 = vmatpush.msra.mxu0 0.0
        %1507 = vmatpush.msra.mxu0 0.0
        %1508 = vmatpush.msra.mxu0 0.0
        %1509 = vmatpush.msra.mxu0 0.0
        %1510 = vmatpush.msra.mxu0 0.0
        %1511 = vmatpush.msra.mxu0 0.0
        %1512 = vmatpush.msra.mxu0 0.0
        %1513 = vmatpush.msra.mxu0 0.0
        %1514 = vmatpush.msra.mxu0 0.0
        %1515 = vmatpush.msra.mxu0 0.0
        %1516 = vmatpush.msra.mxu0 0.0
        %1517 = vmatpush.msra.mxu0 0.0
        %1518 = vmatpush.msra.mxu0 0.0
        %1519 = vmatpush.msra.mxu0 0.0
        %1520 = vmatpush.msra.mxu0 %v1500
        %1521 = vmatmul.f32.gmra.mxu0 %v595
        %v1522 = vpop.f32.mrf.mxu0
        %v1523 = vadd.f32 0.0, %v1522
        %1524 = vdwg.mxu0
        %1525 = vmatpush.msra.mxu0 0.0
        %1526 = vmatpush.msra.mxu0 0.0
        %1527 = vmatpush.msra.mxu0 0.0
        %1528 = vmatpush.msra.mxu0 0.0
        %1529 = vmatpush.msra.mxu0 0.0
        %1530 = vmatpush.msra.mxu0 0.0
        %1531 = vmatpush.msra.mxu0 0.0
        %1532 = vmatpush.msra.mxu0 0.0
        %1533 = vmatpush.msra.mxu0 0.0
        %1534 = vmatpush.msra.mxu0 0.0
        %1535 = vmatpush.msra.mxu0 0.0
        %1536 = vmatpush.msra.mxu0 0.0
        %1537 = vmatpush.msra.mxu0 0.0
        %1538 = vmatpush.msra.mxu0 0.0
        %1539 = vmatpush.msra.mxu0 0.0
        %1540 = vmatpush.msra.mxu0 %v1503
        %1541 = vmatmul.f32.gmra.mxu0 %v595
        %v1542 = vpop.f32.mrf.mxu0
        %v1543 = vadd.f32 0.0, %v1542
        %1544 = vdwg.mxu0
        %v1545 = vadd.f32 %v1477, %v1523
        %v1546 = vadd.f32 %v1497, %v1543
        %v1547 = vadd.f32 %v1545, %v648
        %v1548 = vadd.f32 %v1546, %v648
        %v1549 = vmax.f32 %v1547, 0.0
        %v1550 = vmax.f32 %v1548, 0.0
        %1551 = vrot.lane.b32.xlu0 %v1549, 1
        %v1552 = vpop.permute.xlu0 %1551
        %1553 = vrot.lane.b32.xlu0 %v1550, 1
        %v1554 = vpop.permute.xlu0 %1553
        %v1555 = vsel %vm658, %v1552, %v1554
        %v1556 = vsel %vm658, %v1554, %v1552
        %v1557 = vsel %vm663, %v1556, 0.0
        %v1558 = vsel %vm664, %v1555, 0.0
        %1559 = vrot.lane.b32.xlu0 %v1549, 127
        %v1560 = vpop.permute.xlu0 %1559
        %1561 = vrot.lane.b32.xlu0 %v1550, 127
        %v1562 = vpop.permute.xlu0 %1561
        %v1563 = vsel %vm671, %v1560, %v1562
        %v1564 = vsel %vm671, %v1562, %v1560
        %v1565 = vsel %vm676, %v1563, 0.0
        %v1566 = vsel %vm677, %v1564, 0.0
        %v1568 = vsel %vm423, %v1549, 0
        %v1571 = vsel %vm423, %v1550, 0
        %1573 = vmatpush.msra.mxu0 0.0
        %1574 = vmatpush.msra.mxu0 0.0
        %1575 = vmatpush.msra.mxu0 0.0
        %1576 = vmatpush.msra.mxu0 0.0
        %1577 = vmatpush.msra.mxu0 0.0
        %1578 = vmatpush.msra.mxu0 0.0
        %1579 = vmatpush.msra.mxu0 0.0
        %1580 = vmatpush.msra.mxu0 0.0
        %1581 = vmatpush.msra.mxu0 0.0
        %1582 = vmatpush.msra.mxu0 0.0
        %1583 = vmatpush.msra.mxu0 0.0
        %1584 = vmatpush.msra.mxu0 0.0
        %1585 = vmatpush.msra.mxu0 0.0
        %1586 = vmatpush.msra.mxu0 0.0
        %1587 = vmatpush.msra.mxu0 0.0
        %1588 = vmatpush.msra.mxu0 %v1568
        %1589 = vmatmul.f32.gmra.mxu0 %v681
        %v1590 = vpop.f32.mrf.mxu0
        %v1591 = vadd.f32 0.0, %v1590
        %1592 = vdwg.mxu0
        %1593 = vmatpush.msra.mxu0 0.0
        %1594 = vmatpush.msra.mxu0 0.0
        %1595 = vmatpush.msra.mxu0 0.0
        %1596 = vmatpush.msra.mxu0 0.0
        %1597 = vmatpush.msra.mxu0 0.0
        %1598 = vmatpush.msra.mxu0 0.0
        %1599 = vmatpush.msra.mxu0 0.0
        %1600 = vmatpush.msra.mxu0 0.0
        %1601 = vmatpush.msra.mxu0 0.0
        %1602 = vmatpush.msra.mxu0 0.0
        %1603 = vmatpush.msra.mxu0 0.0
        %1604 = vmatpush.msra.mxu0 0.0
        %1605 = vmatpush.msra.mxu0 0.0
        %1606 = vmatpush.msra.mxu0 0.0
        %1607 = vmatpush.msra.mxu0 0.0
        %1608 = vmatpush.msra.mxu0 %v1571
        %1609 = vmatmul.f32.gmra.mxu0 %v681
        %v1610 = vpop.f32.mrf.mxu0
        %v1611 = vadd.f32 0.0, %v1610
        %1612 = vdwg.mxu0
        %v1614 = vsel %vm423, %v1557, 0
        %v1617 = vsel %vm423, %v1558, 0
        %1619 = vmatpush.msra.mxu0 0.0
        %1620 = vmatpush.msra.mxu0 0.0
        %1621 = vmatpush.msra.mxu0 0.0
        %1622 = vmatpush.msra.mxu0 0.0
        %1623 = vmatpush.msra.mxu0 0.0
        %1624 = vmatpush.msra.mxu0 0.0
        %1625 = vmatpush.msra.mxu0 0.0
        %1626 = vmatpush.msra.mxu0 0.0
        %1627 = vmatpush.msra.mxu0 0.0
        %1628 = vmatpush.msra.mxu0 0.0
        %1629 = vmatpush.msra.mxu0 0.0
        %1630 = vmatpush.msra.mxu0 0.0
        %1631 = vmatpush.msra.mxu0 0.0
        %1632 = vmatpush.msra.mxu0 0.0
        %1633 = vmatpush.msra.mxu0 0.0
        %1634 = vmatpush.msra.mxu0 %v1614
        %1635 = vmatmul.f32.gmra.mxu0 %v730
        %v1636 = vpop.f32.mrf.mxu0
        %v1637 = vadd.f32 %v1591, %v1636
        %1638 = vdwg.mxu0
        %1639 = vmatpush.msra.mxu0 0.0
        %1640 = vmatpush.msra.mxu0 0.0
        %1641 = vmatpush.msra.mxu0 0.0
        %1642 = vmatpush.msra.mxu0 0.0
        %1643 = vmatpush.msra.mxu0 0.0
        %1644 = vmatpush.msra.mxu0 0.0
        %1645 = vmatpush.msra.mxu0 0.0
        %1646 = vmatpush.msra.mxu0 0.0
        %1647 = vmatpush.msra.mxu0 0.0
        %1648 = vmatpush.msra.mxu0 0.0
        %1649 = vmatpush.msra.mxu0 0.0
        %1650 = vmatpush.msra.mxu0 0.0
        %1651 = vmatpush.msra.mxu0 0.0
        %1652 = vmatpush.msra.mxu0 0.0
        %1653 = vmatpush.msra.mxu0 0.0
        %1654 = vmatpush.msra.mxu0 %v1617
        %1655 = vmatmul.f32.gmra.mxu0 %v730
        %v1656 = vpop.f32.mrf.mxu0
        %v1657 = vadd.f32 %v1611, %v1656
        %1658 = vdwg.mxu0
        %v1660 = vsel %vm423, %v1565, 0
        %v1663 = vsel %vm423, %v1566, 0
        %1665 = vmatpush.msra.mxu0 0.0
        %1666 = vmatpush.msra.mxu0 0.0
        %1667 = vmatpush.msra.mxu0 0.0
        %1668 = vmatpush.msra.mxu0 0.0
        %1669 = vmatpush.msra.mxu0 0.0
        %1670 = vmatpush.msra.mxu0 0.0
        %1671 = vmatpush.msra.mxu0 0.0
        %1672 = vmatpush.msra.mxu0 0.0
        %1673 = vmatpush.msra.mxu0 0.0
        %1674 = vmatpush.msra.mxu0 0.0
        %1675 = vmatpush.msra.mxu0 0.0
        %1676 = vmatpush.msra.mxu0 0.0
        %1677 = vmatpush.msra.mxu0 0.0
        %1678 = vmatpush.msra.mxu0 0.0
        %1679 = vmatpush.msra.mxu0 0.0
        %1680 = vmatpush.msra.mxu0 %v1660
        %1681 = vmatmul.f32.gmra.mxu0 %v779
        %v1682 = vpop.f32.mrf.mxu0
        %v1683 = vadd.f32 0.0, %v1682
        %1684 = vdwg.mxu0
        %1685 = vmatpush.msra.mxu0 0.0
        %1686 = vmatpush.msra.mxu0 0.0
        %1687 = vmatpush.msra.mxu0 0.0
        %1688 = vmatpush.msra.mxu0 0.0
        %1689 = vmatpush.msra.mxu0 0.0
        %1690 = vmatpush.msra.mxu0 0.0
        %1691 = vmatpush.msra.mxu0 0.0
        %1692 = vmatpush.msra.mxu0 0.0
        %1693 = vmatpush.msra.mxu0 0.0
        %1694 = vmatpush.msra.mxu0 0.0
        %1695 = vmatpush.msra.mxu0 0.0
        %1696 = vmatpush.msra.mxu0 0.0
        %1697 = vmatpush.msra.mxu0 0.0
        %1698 = vmatpush.msra.mxu0 0.0
        %1699 = vmatpush.msra.mxu0 0.0
        %1700 = vmatpush.msra.mxu0 %v1663
        %1701 = vmatmul.f32.gmra.mxu0 %v779
        %v1702 = vpop.f32.mrf.mxu0
        %v1703 = vadd.f32 0.0, %v1702
        %1704 = vdwg.mxu0
        %v1705 = vadd.f32 %v1637, %v1683
        %v1706 = vadd.f32 %v1657, %v1703
        %v1707 = vadd.f32 %v1705, %v832
        %v1708 = vadd.f32 %v1706, %v832
        %v1709 = vmax.f32 %v1707, 0.0
        %v1710 = vmax.f32 %v1708, 0.0
        %v1712 = vsel %vm423, %v1709, 0
        %v1715 = vsel %vm423, %v1710, 0
        %1717 = vmatpush.msra.mxu0 0.0
        %1718 = vmatpush.msra.mxu0 0.0
        %1719 = vmatpush.msra.mxu0 0.0
        %1720 = vmatpush.msra.mxu0 0.0
        %1721 = vmatpush.msra.mxu0 0.0
        %1722 = vmatpush.msra.mxu0 0.0
        %1723 = vmatpush.msra.mxu0 0.0
        %1724 = vmatpush.msra.mxu0 0.0
        %1725 = vmatpush.msra.mxu0 0.0
        %1726 = vmatpush.msra.mxu0 0.0
        %1727 = vmatpush.msra.mxu0 0.0
        %1728 = vmatpush.msra.mxu0 0.0
        %1729 = vmatpush.msra.mxu0 0.0
        %1730 = vmatpush.msra.mxu0 0.0
        %1731 = vmatpush.msra.mxu0 0.0
        %1732 = vmatpush.msra.mxu0 %v1712
        %1733 = vmatmul.f32.gmra.mxu0 %v849
        %v1734 = vpop.f32.mrf.mxu0
        %v1735 = vadd.f32 %v841, %v1734
        %1736 = vmatmul.f32.gmra.mxu0 %v852
        %v1737 = vpop.f32.mrf.mxu0
        %v1738 = vadd.f32 %v846, %v1737
        %1739 = vdwg.mxu0
        %1740 = vmatpush.msra.mxu0 0.0
        %1741 = vmatpush.msra.mxu0 0.0
        %1742 = vmatpush.msra.mxu0 0.0
        %1743 = vmatpush.msra.mxu0 0.0
        %1744 = vmatpush.msra.mxu0 0.0
        %1745 = vmatpush.msra.mxu0 0.0
        %1746 = vmatpush.msra.mxu0 0.0
        %1747 = vmatpush.msra.mxu0 0.0
        %1748 = vmatpush.msra.mxu0 0.0
        %1749 = vmatpush.msra.mxu0 0.0
        %1750 = vmatpush.msra.mxu0 0.0
        %1751 = vmatpush.msra.mxu0 0.0
        %1752 = vmatpush.msra.mxu0 0.0
        %1753 = vmatpush.msra.mxu0 0.0
        %1754 = vmatpush.msra.mxu0 0.0
        %1755 = vmatpush.msra.mxu0 %v1715
        %1756 = vmatmul.f32.gmra.mxu0 %v849
        %v1757 = vpop.f32.mrf.mxu0
        %v1758 = vadd.f32 %v841, %v1757
        %1759 = vmatmul.f32.gmra.mxu0 %v852
        %v1760 = vpop.f32.mrf.mxu0
        %v1761 = vadd.f32 %v846, %v1760
        %1762 = vdwg.mxu0
        %s1763 = scalar_lea.vmem %s353, 64 [#allocation5]
        %1764 = vst [vmem:[%s1763] sm:$0xff] %v1735
        %1765 = vst [vmem:[%s1763 + $0x8] sm:$0xff] %v1758
        %1766 = vst [vmem:[%s1763 + $0x10] sm:$0xff] %v1738
        %1767 = vst [vmem:[%s1763 + $0x18] sm:$0xff] %v1761
        %s1768 = scalar_lea.vmem %s318, 24 [#allocation2]
        %v1769 = vld [vmem:[%s1768] sm:$0xff]
        %1771 = vst [vmem:[#allocation1] ss:$2 sm:$0xff] %v1769
        %v1772 = vld.sshfl [vmem:[#allocation1] sm:$0xff pattern:$0x75316420]
        %v1773 = vld.sshfl [vmem:[#allocation1 + $0x8] sm:$0xff pattern:$0x75316420]
        %v1774 = vsel %vm423, %v1772, 0
        %v1776 = vsel %vm423, %v1773, 0
        %1778 = vmatpush.msra.mxu0 0.0
        %1779 = vmatpush.msra.mxu0 0.0
        %1780 = vmatpush.msra.mxu0 0.0
        %1781 = vmatpush.msra.mxu0 0.0
        %1782 = vmatpush.msra.mxu0 0.0
        %1783 = vmatpush.msra.mxu0 0.0
        %1784 = vmatpush.msra.mxu0 0.0
        %1785 = vmatpush.msra.mxu0 0.0
        %1786 = vmatpush.msra.mxu0 0.0
        %1787 = vmatpush.msra.mxu0 0.0
        %1788 = vmatpush.msra.mxu0 0.0
        %1789 = vmatpush.msra.mxu0 0.0
        %1790 = vmatpush.msra.mxu0 0.0
        %1791 = vmatpush.msra.mxu0 0.0
        %1792 = vmatpush.msra.mxu0 0.0
        %1793 = vmatpush.msra.mxu0 %v1774
        %1794 = vmatmul.f32.gmra.mxu0 %v421
        %v1795 = vpop.f32.mrf.mxu0
        %v1796 = vadd.f32 %v413, %v1795
        %1797 = vdwg.mxu0
        %1798 = vmatpush.msra.mxu0 0.0
        %1799 = vmatpush.msra.mxu0 0.0
        %1800 = vmatpush.msra.mxu0 0.0
        %1801 = vmatpush.msra.mxu0 0.0
        %1802 = vmatpush.msra.mxu0 0.0
        %1803 = vmatpush.msra.mxu0 0.0
        %1804 = vmatpush.msra.mxu0 0.0
        %1805 = vmatpush.msra.mxu0 0.0
        %1806 = vmatpush.msra.mxu0 0.0
        %1807 = vmatpush.msra.mxu0 0.0
        %1808 = vmatpush.msra.mxu0 0.0
        %1809 = vmatpush.msra.mxu0 0.0
        %1810 = vmatpush.msra.mxu0 0.0
        %1811 = vmatpush.msra.mxu0 0.0
        %1812 = vmatpush.msra.mxu0 0.0
        %1813 = vmatpush.msra.mxu0 %v1776
        %1814 = vmatmul.f32.gmra.mxu0 %v421
        %v1815 = vpop.f32.mrf.mxu0
        %v1816 = vadd.f32 %v413, %v1815
        %1817 = vdwg.mxu0
        %v1818 = vmax.f32 %v1796, 0.0
        %v1819 = vmax.f32 %v1816, 0.0
        %1820 = vrot.lane.b32.xlu0 %v1818, 16
        %v1821 = vpop.permute.xlu0 %1820
        %1822 = vrot.lane.b32.xlu0 %v1819, 16
        %v1823 = vpop.permute.xlu0 %1822
        %v1824 = vsel %vm474, %v1821, %v1823
        %v1825 = vsel %vm474, %v1823, %v1821
        %v1826 = vsel %vm479, %v1825, 0.0
        %v1827 = vsel %vm480, %v1824, 0.0
        %1828 = vrot.lane.b32.xlu0 %v1818, 112
        %v1829 = vpop.permute.xlu0 %1828
        %1830 = vrot.lane.b32.xlu0 %v1819, 112
        %v1831 = vpop.permute.xlu0 %1830
        %v1832 = vsel %vm487, %v1829, %v1831
        %v1833 = vsel %vm487, %v1831, %v1829
        %v1834 = vsel %vm492, %v1832, 0.0
        %v1835 = vsel %vm493, %v1833, 0.0
        %v1837 = vsel %vm423, %v1818, 0
        %v1840 = vsel %vm423, %v1819, 0
        %1842 = vmatpush.msra.mxu0 0.0
        %1843 = vmatpush.msra.mxu0 0.0
        %1844 = vmatpush.msra.mxu0 0.0
        %1845 = vmatpush.msra.mxu0 0.0
        %1846 = vmatpush.msra.mxu0 0.0
        %1847 = vmatpush.msra.mxu0 0.0
        %1848 = vmatpush.msra.mxu0 0.0
        %1849 = vmatpush.msra.mxu0 0.0
        %1850 = vmatpush.msra.mxu0 0.0
        %1851 = vmatpush.msra.mxu0 0.0
        %1852 = vmatpush.msra.mxu0 0.0
        %1853 = vmatpush.msra.mxu0 0.0
        %1854 = vmatpush.msra.mxu0 0.0
        %1855 = vmatpush.msra.mxu0 0.0
        %1856 = vmatpush.msra.mxu0 0.0
        %1857 = vmatpush.msra.mxu0 %v1837
        %1858 = vmatmul.f32.gmra.mxu0 %v497
        %v1859 = vpop.f32.mrf.mxu0
        %v1860 = vadd.f32 0.0, %v1859
        %1861 = vdwg.mxu0
        %1862 = vmatpush.msra.mxu0 0.0
        %1863 = vmatpush.msra.mxu0 0.0
        %1864 = vmatpush.msra.mxu0 0.0
        %1865 = vmatpush.msra.mxu0 0.0
        %1866 = vmatpush.msra.mxu0 0.0
        %1867 = vmatpush.msra.mxu0 0.0
        %1868 = vmatpush.msra.mxu0 0.0
        %1869 = vmatpush.msra.mxu0 0.0
        %1870 = vmatpush.msra.mxu0 0.0
        %1871 = vmatpush.msra.mxu0 0.0
        %1872 = vmatpush.msra.mxu0 0.0
        %1873 = vmatpush.msra.mxu0 0.0
        %1874 = vmatpush.msra.mxu0 0.0
        %1875 = vmatpush.msra.mxu0 0.0
        %1876 = vmatpush.msra.mxu0 0.0
        %1877 = vmatpush.msra.mxu0 %v1840
        %1878 = vmatmul.f32.gmra.mxu0 %v497
        %v1879 = vpop.f32.mrf.mxu0
        %v1880 = vadd.f32 0.0, %v1879
        %1881 = vdwg.mxu0
        %v1883 = vsel %vm423, %v1826, 0
        %v1886 = vsel %vm423, %v1827, 0
        %1888 = vmatpush.msra.mxu0 0.0
        %1889 = vmatpush.msra.mxu0 0.0
        %1890 = vmatpush.msra.mxu0 0.0
        %1891 = vmatpush.msra.mxu0 0.0
        %1892 = vmatpush.msra.mxu0 0.0
        %1893 = vmatpush.msra.mxu0 0.0
        %1894 = vmatpush.msra.mxu0 0.0
        %1895 = vmatpush.msra.mxu0 0.0
        %1896 = vmatpush.msra.mxu0 0.0
        %1897 = vmatpush.msra.mxu0 0.0
        %1898 = vmatpush.msra.mxu0 0.0
        %1899 = vmatpush.msra.mxu0 0.0
        %1900 = vmatpush.msra.mxu0 0.0
        %1901 = vmatpush.msra.mxu0 0.0
        %1902 = vmatpush.msra.mxu0 0.0
        %1903 = vmatpush.msra.mxu0 %v1883
        %1904 = vmatmul.f32.gmra.mxu0 %v546
        %v1905 = vpop.f32.mrf.mxu0
        %v1906 = vadd.f32 %v1860, %v1905
        %1907 = vdwg.mxu0
        %1908 = vmatpush.msra.mxu0 0.0
        %1909 = vmatpush.msra.mxu0 0.0
        %1910 = vmatpush.msra.mxu0 0.0
        %1911 = vmatpush.msra.mxu0 0.0
        %1912 = vmatpush.msra.mxu0 0.0
        %1913 = vmatpush.msra.mxu0 0.0
        %1914 = vmatpush.msra.mxu0 0.0
        %1915 = vmatpush.msra.mxu0 0.0
        %1916 = vmatpush.msra.mxu0 0.0
        %1917 = vmatpush.msra.mxu0 0.0
        %1918 = vmatpush.msra.mxu0 0.0
        %1919 = vmatpush.msra.mxu0 0.0
        %1920 = vmatpush.msra.mxu0 0.0
        %1921 = vmatpush.msra.mxu0 0.0
        %1922 = vmatpush.msra.mxu0 0.0
        %1923 = vmatpush.msra.mxu0 %v1886
        %1924 = vmatmul.f32.gmra.mxu0 %v546
        %v1925 = vpop.f32.mrf.mxu0
        %v1926 = vadd.f32 %v1880, %v1925
        %1927 = vdwg.mxu0
        %v1929 = vsel %vm423, %v1834, 0
        %v1932 = vsel %vm423, %v1835, 0
        %1934 = vmatpush.msra.mxu0 0.0
        %1935 = vmatpush.msra.mxu0 0.0
        %1936 = vmatpush.msra.mxu0 0.0
        %1937 = vmatpush.msra.mxu0 0.0
        %1938 = vmatpush.msra.mxu0 0.0
        %1939 = vmatpush.msra.mxu0 0.0
        %1940 = vmatpush.msra.mxu0 0.0
        %1941 = vmatpush.msra.mxu0 0.0
        %1942 = vmatpush.msra.mxu0 0.0
        %1943 = vmatpush.msra.mxu0 0.0
        %1944 = vmatpush.msra.mxu0 0.0
        %1945 = vmatpush.msra.mxu0 0.0
        %1946 = vmatpush.msra.mxu0 0.0
        %1947 = vmatpush.msra.mxu0 0.0
        %1948 = vmatpush.msra.mxu0 0.0
        %1949 = vmatpush.msra.mxu0 %v1929
        %1950 = vmatmul.f32.gmra.mxu0 %v595
        %v1951 = vpop.f32.mrf.mxu0
        %v1952 = vadd.f32 0.0, %v1951
        %1953 = vdwg.mxu0
        %1954 = vmatpush.msra.mxu0 0.0
        %1955 = vmatpush.msra.mxu0 0.0
        %1956 = vmatpush.msra.mxu0 0.0
        %1957 = vmatpush.msra.mxu0 0.0
        %1958 = vmatpush.msra.mxu0 0.0
        %1959 = vmatpush.msra.mxu0 0.0
        %1960 = vmatpush.msra.mxu0 0.0
        %1961 = vmatpush.msra.mxu0 0.0
        %1962 = vmatpush.msra.mxu0 0.0
        %1963 = vmatpush.msra.mxu0 0.0
        %1964 = vmatpush.msra.mxu0 0.0
        %1965 = vmatpush.msra.mxu0 0.0
        %1966 = vmatpush.msra.mxu0 0.0
        %1967 = vmatpush.msra.mxu0 0.0
        %1968 = vmatpush.msra.mxu0 0.0
        %1969 = vmatpush.msra.mxu0 %v1932
        %1970 = vmatmul.f32.gmra.mxu0 %v595
        %v1971 = vpop.f32.mrf.mxu0
        %v1972 = vadd.f32 0.0, %v1971
        %1973 = vdwg.mxu0
        %v1974 = vadd.f32 %v1906, %v1952
        %v1975 = vadd.f32 %v1926, %v1972
        %v1976 = vadd.f32 %v1974, %v648
        %v1977 = vadd.f32 %v1975, %v648
        %v1978 = vmax.f32 %v1976, 0.0
        %v1979 = vmax.f32 %v1977, 0.0
        %1980 = vrot.lane.b32.xlu0 %v1978, 1
        %v1981 = vpop.permute.xlu0 %1980
        %1982 = vrot.lane.b32.xlu0 %v1979, 1
        %v1983 = vpop.permute.xlu0 %1982
        %v1984 = vsel %vm658, %v1981, %v1983
        %v1985 = vsel %vm658, %v1983, %v1981
        %v1986 = vsel %vm663, %v1985, 0.0
        %v1987 = vsel %vm664, %v1984, 0.0
        %1988 = vrot.lane.b32.xlu0 %v1978, 127
        %v1989 = vpop.permute.xlu0 %1988
        %1990 = vrot.lane.b32.xlu0 %v1979, 127
        %v1991 = vpop.permute.xlu0 %1990
        %v1992 = vsel %vm671, %v1989, %v1991
        %v1993 = vsel %vm671, %v1991, %v1989
        %v1994 = vsel %vm676, %v1992, 0.0
        %v1995 = vsel %vm677, %v1993, 0.0
        %v1997 = vsel %vm423, %v1978, 0
        %v2000 = vsel %vm423, %v1979, 0
        %2002 = vmatpush.msra.mxu0 0.0
        %2003 = vmatpush.msra.mxu0 0.0
        %2004 = vmatpush.msra.mxu0 0.0
        %2005 = vmatpush.msra.mxu0 0.0
        %2006 = vmatpush.msra.mxu0 0.0
        %2007 = vmatpush.msra.mxu0 0.0
        %2008 = vmatpush.msra.mxu0 0.0
        %2009 = vmatpush.msra.mxu0 0.0
        %2010 = vmatpush.msra.mxu0 0.0
        %2011 = vmatpush.msra.mxu0 0.0
        %2012 = vmatpush.msra.mxu0 0.0
        %2013 = vmatpush.msra.mxu0 0.0
        %2014 = vmatpush.msra.mxu0 0.0
        %2015 = vmatpush.msra.mxu0 0.0
        %2016 = vmatpush.msra.mxu0 0.0
        %2017 = vmatpush.msra.mxu0 %v1997
        %2018 = vmatmul.f32.gmra.mxu0 %v681
        %v2019 = vpop.f32.mrf.mxu0
        %v2020 = vadd.f32 0.0, %v2019
        %2021 = vdwg.mxu0
        %2022 = vmatpush.msra.mxu0 0.0
        %2023 = vmatpush.msra.mxu0 0.0
        %2024 = vmatpush.msra.mxu0 0.0
        %2025 = vmatpush.msra.mxu0 0.0
        %2026 = vmatpush.msra.mxu0 0.0
        %2027 = vmatpush.msra.mxu0 0.0
        %2028 = vmatpush.msra.mxu0 0.0
        %2029 = vmatpush.msra.mxu0 0.0
        %2030 = vmatpush.msra.mxu0 0.0
        %2031 = vmatpush.msra.mxu0 0.0
        %2032 = vmatpush.msra.mxu0 0.0
        %2033 = vmatpush.msra.mxu0 0.0
        %2034 = vmatpush.msra.mxu0 0.0
        %2035 = vmatpush.msra.mxu0 0.0
        %2036 = vmatpush.msra.mxu0 0.0
        %2037 = vmatpush.msra.mxu0 %v2000
        %2038 = vmatmul.f32.gmra.mxu0 %v681
        %v2039 = vpop.f32.mrf.mxu0
        %v2040 = vadd.f32 0.0, %v2039
        %2041 = vdwg.mxu0
        %v2043 = vsel %vm423, %v1986, 0
        %v2046 = vsel %vm423, %v1987, 0
        %2048 = vmatpush.msra.mxu0 0.0
        %2049 = vmatpush.msra.mxu0 0.0
        %2050 = vmatpush.msra.mxu0 0.0
        %2051 = vmatpush.msra.mxu0 0.0
        %2052 = vmatpush.msra.mxu0 0.0
        %2053 = vmatpush.msra.mxu0 0.0
        %2054 = vmatpush.msra.mxu0 0.0
        %2055 = vmatpush.msra.mxu0 0.0
        %2056 = vmatpush.msra.mxu0 0.0
        %2057 = vmatpush.msra.mxu0 0.0
        %2058 = vmatpush.msra.mxu0 0.0
        %2059 = vmatpush.msra.mxu0 0.0
        %2060 = vmatpush.msra.mxu0 0.0
        %2061 = vmatpush.msra.mxu0 0.0
        %2062 = vmatpush.msra.mxu0 0.0
        %2063 = vmatpush.msra.mxu0 %v2043
        %2064 = vmatmul.f32.gmra.mxu0 %v730
        %v2065 = vpop.f32.mrf.mxu0
        %v2066 = vadd.f32 %v2020, %v2065
        %2067 = vdwg.mxu0
        %2068 = vmatpush.msra.mxu0 0.0
        %2069 = vmatpush.msra.mxu0 0.0
        %2070 = vmatpush.msra.mxu0 0.0
        %2071 = vmatpush.msra.mxu0 0.0
        %2072 = vmatpush.msra.mxu0 0.0
        %2073 = vmatpush.msra.mxu0 0.0
        %2074 = vmatpush.msra.mxu0 0.0
        %2075 = vmatpush.msra.mxu0 0.0
        %2076 = vmatpush.msra.mxu0 0.0
        %2077 = vmatpush.msra.mxu0 0.0
        %2078 = vmatpush.msra.mxu0 0.0
        %2079 = vmatpush.msra.mxu0 0.0
        %2080 = vmatpush.msra.mxu0 0.0
        %2081 = vmatpush.msra.mxu0 0.0
        %2082 = vmatpush.msra.mxu0 0.0
        %2083 = vmatpush.msra.mxu0 %v2046
        %2084 = vmatmul.f32.gmra.mxu0 %v730
        %v2085 = vpop.f32.mrf.mxu0
        %v2086 = vadd.f32 %v2040, %v2085
        %2087 = vdwg.mxu0
        %v2089 = vsel %vm423, %v1994, 0
        %v2092 = vsel %vm423, %v1995, 0
        %2094 = vmatpush.msra.mxu0 0.0
        %2095 = vmatpush.msra.mxu0 0.0
        %2096 = vmatpush.msra.mxu0 0.0
        %2097 = vmatpush.msra.mxu0 0.0
        %2098 = vmatpush.msra.mxu0 0.0
        %2099 = vmatpush.msra.mxu0 0.0
        %2100 = vmatpush.msra.mxu0 0.0
        %2101 = vmatpush.msra.mxu0 0.0
        %2102 = vmatpush.msra.mxu0 0.0
        %2103 = vmatpush.msra.mxu0 0.0
        %2104 = vmatpush.msra.mxu0 0.0
        %2105 = vmatpush.msra.mxu0 0.0
        %2106 = vmatpush.msra.mxu0 0.0
        %2107 = vmatpush.msra.mxu0 0.0
        %2108 = vmatpush.msra.mxu0 0.0
        %2109 = vmatpush.msra.mxu0 %v2089
        %2110 = vmatmul.f32.gmra.mxu0 %v779
        %v2111 = vpop.f32.mrf.mxu0
        %v2112 = vadd.f32 0.0, %v2111
        %2113 = vdwg.mxu0
        %2114 = vmatpush.msra.mxu0 0.0
        %2115 = vmatpush.msra.mxu0 0.0
        %2116 = vmatpush.msra.mxu0 0.0
        %2117 = vmatpush.msra.mxu0 0.0
        %2118 = vmatpush.msra.mxu0 0.0
        %2119 = vmatpush.msra.mxu0 0.0
        %2120 = vmatpush.msra.mxu0 0.0
        %2121 = vmatpush.msra.mxu0 0.0
        %2122 = vmatpush.msra.mxu0 0.0
        %2123 = vmatpush.msra.mxu0 0.0
        %2124 = vmatpush.msra.mxu0 0.0
        %2125 = vmatpush.msra.mxu0 0.0
        %2126 = vmatpush.msra.mxu0 0.0
        %2127 = vmatpush.msra.mxu0 0.0
        %2128 = vmatpush.msra.mxu0 0.0
        %2129 = vmatpush.msra.mxu0 %v2092
        %2130 = vmatmul.f32.gmra.mxu0 %v779
        %v2131 = vpop.f32.mrf.mxu0
        %v2132 = vadd.f32 0.0, %v2131
        %2133 = vdwg.mxu0
        %v2134 = vadd.f32 %v2066, %v2112
        %v2135 = vadd.f32 %v2086, %v2132
        %v2136 = vadd.f32 %v2134, %v832
        %v2137 = vadd.f32 %v2135, %v832
        %v2138 = vmax.f32 %v2136, 0.0
        %v2139 = vmax.f32 %v2137, 0.0
        %v2141 = vsel %vm423, %v2138, 0
        %v2144 = vsel %vm423, %v2139, 0
        %2146 = vmatpush.msra.mxu0 0.0
        %2147 = vmatpush.msra.mxu0 0.0
        %2148 = vmatpush.msra.mxu0 0.0
        %2149 = vmatpush.msra.mxu0 0.0
        %2150 = vmatpush.msra.mxu0 0.0
        %2151 = vmatpush.msra.mxu0 0.0
        %2152 = vmatpush.msra.mxu0 0.0
        %2153 = vmatpush.msra.mxu0 0.0
        %2154 = vmatpush.msra.mxu0 0.0
        %2155 = vmatpush.msra.mxu0 0.0
        %2156 = vmatpush.msra.mxu0 0.0
        %2157 = vmatpush.msra.mxu0 0.0
        %2158 = vmatpush.msra.mxu0 0.0
        %2159 = vmatpush.msra.mxu0 0.0
        %2160 = vmatpush.msra.mxu0 0.0
        %2161 = vmatpush.msra.mxu0 %v2141
        %2162 = vmatmul.f32.gmra.mxu0 %v849
        %v2163 = vpop.f32.mrf.mxu0
        %v2164 = vadd.f32 %v841, %v2163
        %2165 = vmatmul.f32.gmra.mxu0 %v852
        %v2166 = vpop.f32.mrf.mxu0
        %v2167 = vadd.f32 %v846, %v2166
        %2168 = vdwg.mxu0
        %2169 = vmatpush.msra.mxu0 0.0
        %2170 = vmatpush.msra.mxu0 0.0
        %2171 = vmatpush.msra.mxu0 0.0
        %2172 = vmatpush.msra.mxu0 0.0
        %2173 = vmatpush.msra.mxu0 0.0
        %2174 = vmatpush.msra.mxu0 0.0
        %2175 = vmatpush.msra.mxu0 0.0
        %2176 = vmatpush.msra.mxu0 0.0
        %2177 = vmatpush.msra.mxu0 0.0
        %2178 = vmatpush.msra.mxu0 0.0
        %2179 = vmatpush.msra.mxu0 0.0
        %2180 = vmatpush.msra.mxu0 0.0
        %2181 = vmatpush.msra.mxu0 0.0
        %2182 = vmatpush.msra.mxu0 0.0
        %2183 = vmatpush.msra.mxu0 0.0
        %2184 = vmatpush.msra.mxu0 %v2144
        %2185 = vmatmul.f32.gmra.mxu0 %v849
        %v2186 = vpop.f32.mrf.mxu0
        %v2187 = vadd.f32 %v841, %v2186
        %2188 = vmatmul.f32.gmra.mxu0 %v852
        %v2189 = vpop.f32.mrf.mxu0
        %v2190 = vadd.f32 %v846, %v2189
        %2191 = vdwg.mxu0
        %s2192 = scalar_lea.vmem %s353, 96 [#allocation5]
        %2193 = vst [vmem:[%s2192] sm:$0xff] %v2164
        %2194 = vst [vmem:[%s2192 + $0x8] sm:$0xff] %v2187
        %2195 = vst [vmem:[%s2192 + $0x10] sm:$0xff] %v2167
        %2196 = vst [vmem:[%s2192 + $0x18] sm:$0xff] %v2190
        %s2197 = sand.u32 %s228, 1
        %s2198 = scalar_lea.sflag [#allocation4], %s2197
        %s2199 = sand.u32 %s228, 1
        %s2200 = smul.addr %s2199, 128
        %s2201 = scalar_lea.vmem [#allocation5], %s2200
        // Predicated region
        $region61: #{tpu_custom_call.1} parent=55 // pred_check
          %p2202 = pneg %p238
        $region62: #{tpu_custom_call.1} parent=55 // pred_check_branch
          %2204 = sbr.rel (%p2202) target = $region64
        $region63: #{tpu_custom_call.1} parent=55 // pred_region
          %s2205 = smul.u32 4, %s26
          %2207 = vsyncadd %s2198, 0
          %s2208 = smul.addr %s2205, 4
          %s2209 = smul.addr %s2208, 8
          %s2210 = scalar_lea.hbm %s9, %s2209
          %s2211 = sshll.u32 %s2201, 4
          %s2212 = int_to_ptr.vmem [resolvable:$true] %s2211
          %s2213 = sshll.u32 %s2210, 4
          %s2214 = int_to_ptr.hbm [resolvable:$true] %s2213
          %2219 = dma.vmem_to_hbm [thread:$0]  %s2212, 2048, %s2214, %s2198, 256, 256, 16
        $region64: #{tpu_custom_call.1} parent=55 // pred_fallthru
          _
      $region56: #{tpu_custom_call.1} parent=5 // pred_fallthru
        _
      %p2220 = scmp.le.s32.totalorder 2, %s21
      // Predicated region
      $region65: #{tpu_custom_call.1} parent=5 // pred_check
        %p2221 = pneg %p2220
      $region66: #{tpu_custom_call.1} parent=5 // pred_check_branch
        %2223 = sbr.rel (%p2221) target = $region68
      $region67: #{tpu_custom_call.1} parent=5 // pred_region
        %s2224 = ssub.s32 %s21, 2
        // Predicated region
        $region69: #{tpu_custom_call.1} parent=67 // pred_check
          %p2225 = pneg %p244
        $region70: #{tpu_custom_call.1} parent=67 // pred_check_branch
          %2227 = sbr.rel (%p2225) target = $region72
        $region71: #{tpu_custom_call.1} parent=67 // pred_region
          %s2228 = sand.u32 %s229, 1
          %s2229 = scalar_lea.sflag [#allocation4], %s2228
          %s2230 = sand.u32 %s229, 1
          %s2231 = smul.addr %s2230, 128
          %s2232 = scalar_lea.vmem [#allocation5], %s2231
          %2234 = dma.done %s2229, 2048
        $region72: #{tpu_custom_call.1} parent=67 // pred_fallthru
          _
      $region68: #{tpu_custom_call.1} parent=5 // pred_fallthru
        _
    $region6: #{tpu_custom_call.1} parent=1 // loop_footer
      %s25 = sadd.s32 1, %s21
    $region7: #{tpu_custom_call.1} parent=1 // loop_footer_branch
      %20 = sbr.rel target = $region3
    $region8: #{tpu_custom_call.1} parent=1 // loop_exit
      _
    %2235 = vsyncpa [#allocation3], 1
    %s2236 = scalar_lea.sflag [#allocation3], 1
    %2237 = vsyncpa %s2236, 1
    %2238 = vsyncpa [#allocation4], 1
    %s2239 = scalar_lea.sflag [#allocation4], 1
    %2240 = vsyncpa %s2239, 1

</llo_original>
